<compile_context>
chip_gen: v7x
topology: tpu7x:2x2x1
jax: 0.10.0
libtpu: 0.0.40
codegen_flags: <defaults>
</compile_context>

<pallas_src>
import math
import functools

import numpy as np
import jax
import jax.numpy as jnp
from jax.experimental import pallas as pl
from jax.experimental.pallas import tpu as pltpu

# ---------------------------------------------------------------------------
# Synthetic config constants (mirroring cfg.model.* / cfg.data.*)
# ---------------------------------------------------------------------------
SCALE = 64.0          # cfg -> scale
SSL_WEIGHT = 1.0      # cfg.model.ssl_weight (non-zero -> SSL branch active)
NUM_FAKES = 4         # len(cfg.data.dataset_df.fake_types_train)
RELATIVE_BS = 1       # cfg.model.relative_bs
USE_LOGIT_ADJ = True  # cfg.model.logit_adj

_PRIOR_FAKE = NUM_FAKES / ((NUM_FAKES + 1) * (RELATIVE_BS + 1))
LOGIT_ADJ = math.log(_PRIOR_FAKE / (1.0 - _PRIOR_FAKE)) if USE_LOGIT_ADJ else 0.0
EPS = 1e-8


# ---------------------------------------------------------------------------
# Kernel: grid = (K_tiles,), K is the flattened-video reduction axis.
# ---------------------------------------------------------------------------
def _combined_kernel(x_ref, xc_ref, y_ref,
                     w_bb_ref, b_bb_ref, w_df_ref,
                     w_tbb_ref, b_tbb_ref, w_tp_ref, b_tp_ref,
                     w_pj_ref, b_pj_ref, w_pr_ref, b_pr_ref,
                     loss_ref,                       # (2,) f32 in SMEM
                     feats_acc, featst_acc):         # [N, D] f32 VMEM scratch
    k = pl.program_id(0)

    @pl.when(k == 0)
    def _():
        feats_acc[...] = jnp.zeros_like(feats_acc)
        featst_acc[...] = jnp.zeros_like(featst_acc)
        loss_ref[0] = jnp.float32(0.0)
        loss_ref[1] = jnp.float32(0.0)

    # ---- K-tiled backbone matmuls: bf16 operands, f32 accumulation (MXU).
    feats_acc[...] += jnp.dot(x_ref[...], w_bb_ref[...],
                              preferred_element_type=jnp.float32)
    featst_acc[...] += jnp.dot(xc_ref[...], w_tbb_ref[...],
                               preferred_element_type=jnp.float32)

    # ---- epilogue on the last K step (all f32 VPU/EUP math).
    @pl.when(k == pl.num_programs(0) - 1)
    def _():
        y = y_ref[...]                                           # [N, 1]
        feats = jnp.maximum(feats_acc[...] + b_bb_ref[...], 0.0)     # [N, D]
        feats_t = jnp.maximum(featst_acc[...] + b_tbb_ref[...], 0.0)  # [N, D]

        # df head: scaled cosine classifier, rescaled form
        #   dot(f/||f||, w/||w||) == dot(f, w) * rsqrt(||f||^2) * rsqrt(||w||^2)
        # (avoids a lane-width-1 MXU matmul and the f_norm materialization).
        w_df = w_df_ref[...]                                     # [1, D]
        raw = jnp.sum(feats * w_df, axis=-1, keepdims=True)      # [N, 1]
        inv_f = jax.lax.rsqrt(
            jnp.sum(feats * feats, axis=-1, keepdims=True) + EPS)
        inv_w = jax.lax.rsqrt(jnp.sum(w_df * w_df, keepdims=True) + EPS)
        logits = SCALE * raw * inv_f * inv_w                     # [N, 1]

        # binary cross entropy with logits (numerically stable), batch mean
        z = logits + LOGIT_ADJ
        bce = jnp.maximum(z, 0.0) - z * y + jnp.log1p(jnp.exp(-jnp.abs(z)))
        loss_ref[0] = jnp.sum(bce) * (1.0 / bce.size)

        # target encoder projector (frozen -> stop_gradient, forward-identity)
        targets = jax.lax.stop_gradient(
            jnp.dot(feats_t, w_tp_ref[...],
                    preferred_element_type=jnp.float32) + b_tp_ref[...])

        # ssl head: projector + ReLU + predictor
        proj = jnp.maximum(
            jnp.dot(feats, w_pj_ref[...],
                    preferred_element_type=jnp.float32) + b_pj_ref[...], 0.0)
        preds = jnp.dot(proj, w_pr_ref[...],
                        preferred_element_type=jnp.float32) + b_pr_ref[...]

        # cosine similarity, mean over real samples only (~labels.bool())
        dot_pt = jnp.sum(preds * targets, axis=-1, keepdims=True)
        pn = jnp.sqrt(jnp.sum(preds * preds, axis=-1, keepdims=True))
        tn = jnp.sqrt(jnp.sum(targets * targets, axis=-1, keepdims=True))
        cos = dot_pt / jnp.maximum(pn * tn, EPS)
        mask = (y == 0.0).astype(jnp.float32)
        n_real = jnp.sum(mask)
        loss_ref[1] = jnp.sum(cos * mask) / jnp.maximum(n_real, 1.0)


# ---------------------------------------------------------------------------
# Wrapper (glue: concat in bf16, flatten, grid/BlockSpec setup, skip logic)
# ---------------------------------------------------------------------------
def _pick_k_tile(f_in, max_tk):
    """Largest multiple of 128 that divides f_in, capped at max_tk."""
    if f_in % 128 != 0:
        return f_in                      # fall back: single whole-K block
    tk = min(max_tk, f_in)
    tk -= tk % 128
    while f_in % tk != 0:
        tk -= 128
    return tk


def model_combined_forward(params, videos_df, labels_df,
                           videos_df_clean=None, videos_ssl=None,
                           videos_ssl_clean=None, *, max_k_tile=512):
    def flat_bf16(v):                    # cast before concat: half the HBM copy
        return v.reshape(v.shape[0], -1).astype(jnp.bfloat16)

    if videos_ssl is not None:
        x = jnp.concatenate([flat_bf16(videos_df), flat_bf16(videos_ssl)], axis=0)
        xc = jnp.concatenate([flat_bf16(videos_df_clean),
                              flat_bf16(videos_ssl_clean)], axis=0)
        zeros = jnp.zeros((videos_ssl.shape[0],), dtype=labels_df.dtype)
        labels = jnp.concatenate([labels_df, zeros], axis=0)
    else:
        x = flat_bf16(videos_df)
        xc = flat_bf16(videos_df_clean)
        labels = labels_df

    n, f_in = x.shape
    y = labels.astype(jnp.float32).reshape(n, 1)

    d = params["w_bb"].shape[1]
    p = params["w_pj"].shape[1]

    tk = _pick_k_tile(f_in, max_k_tile)
    k_tiles = f_in // tk

    frozen = jax.lax.stop_gradient       # target encoder: requires_grad=False
    w_bb = params["w_bb"].astype(jnp.bfloat16)
    w_tbb = frozen(params["w_tbb"]).astype(jnp.bfloat16)

    const = lambda k: (0, 0)
    in_specs = [
        pl.BlockSpec((n, tk), lambda k: (0, k)),   # x   (bf16, K-streamed)
        pl.BlockSpec((n, tk), lambda k: (0, k)),   # xc  (bf16, K-streamed)
        pl.BlockSpec((n, 1), const),               # y
        pl.BlockSpec((tk, d), lambda k: (k, 0)),   # w_bb  (bf16, K-streamed)
        pl.BlockSpec((1, d), const),               # b_bb
        pl.BlockSpec((1, d), const),               # w_df (row form)
        pl.BlockSpec((tk, d), lambda k: (k, 0)),   # w_tbb (bf16, K-streamed)
        pl.BlockSpec((1, d), const),               # b_tbb
        pl.BlockSpec((d, p), const),               # w_tp
        pl.BlockSpec((1, p), const),               # b_tp
        pl.BlockSpec((d, p), const),               # w_pj
        pl.BlockSpec((1, p), const),               # b_pj
        pl.BlockSpec((p, p), const),               # w_pr
        pl.BlockSpec((1, p), const),               # b_pr
    ]

    losses = pl.pallas_call(
        _combined_kernel,
        out_shape=jax.ShapeDtypeStruct((2,), jnp.float32),
        grid_spec=pltpu.PrefetchScalarGridSpec(
            num_scalar_prefetch=0,
            grid=(k_tiles,),
            in_specs=in_specs,
            out_specs=pl.BlockSpec(memory_space=pltpu.MemorySpace.SMEM),
            scratch_shapes=[pltpu.VMEM((n, d), jnp.float32),
                            pltpu.VMEM((n, d), jnp.float32)]),
        compiler_params=pltpu.CompilerParams(
            dimension_semantics=("arbitrary",),      # K is a reduction axis
            vmem_limit_bytes=48 * 1024 * 1024),      # fits v7x 64 MiB physical
    )(x, xc, y,
      w_bb, params["b_bb"], params["w_df"],
      w_tbb, frozen(params["b_tbb"]), frozen(params["w_tp"]),
      frozen(params["b_tp"]),
      params["w_pj"], params["b_pj"], params["w_pr"], params["b_pr"])

    loss_df = losses[0]
    loss_ssl = losses[1]

    if math.isclose(SSL_WEIGHT, 0.0):
        loss_ssl = jnp.float32(0.0)
    else:
        # "All labels in the batch are the same" -> skip SSL loss
        all_same = jnp.logical_or(jnp.all(labels == 0), jnp.all(labels == 1))
        loss_ssl = jnp.where(all_same, jnp.float32(0.0), loss_ssl)

    return loss_df, loss_ssl


# ---------------------------------------------------------------------------
# Deterministic parameter init (synthetic weights, no checkpoint load)
# ---------------------------------------------------------------------------
def init_params(key, f_in, d, p):
    ks = jax.random.split(key, 12)

    def w(k, shape, fan_in, dtype=jnp.float32):
        return (jax.random.normal(k, shape, jnp.float32)
                / jnp.sqrt(float(fan_in))).astype(dtype)

    def b(k, dim):
        return 0.01 * jax.random.normal(k, (1, dim), jnp.float32)

    return {
        "w_bb": w(ks[0], (f_in, d), f_in, jnp.bfloat16),   # backbone (bf16)
        "b_bb": b(ks[1], d),
        "w_df": w(ks[2], (1, d), d),                        # df cosine head row
        "w_tbb": w(ks[3], (f_in, d), f_in, jnp.bfloat16),   # target backbone
        "b_tbb": b(ks[4], d),
        "w_tp": w(ks[5], (d, p), d),                        # target projector
        "b_tp": b(ks[6], p),
        "w_pj": w(ks[7], (d, p), d),                        # ssl projector
        "b_pj": b(ks[8], p),
        "w_pr": w(ks[9], (p, p), p),                        # ssl predictor
        "b_pr": b(ks[10], p),
    }


# ---------------------------------------------------------------------------
# Pure-JAX reference (same bf16 rounding of the streamed operands)
# ---------------------------------------------------------------------------
def _reference_forward(params, videos_df, labels_df, videos_df_clean,
                       videos_ssl, videos_ssl_clean):
    mm = functools.partial(jnp.dot, precision=jax.lax.Precision.HIGHEST)
    bf = lambda a: a.astype(jnp.bfloat16).astype(jnp.float32)

    x = jnp.concatenate([videos_df.reshape(videos_df.shape[0], -1),
                         videos_ssl.reshape(videos_ssl.shape[0], -1)], 0)
    xc = jnp.concatenate([videos_df_clean.reshape(videos_df_clean.shape[0], -1),
                          videos_ssl_clean.reshape(videos_ssl_clean.shape[0], -1)], 0)
    labels = jnp.concatenate(
        [labels_df, jnp.zeros((videos_ssl.shape[0],), labels_df.dtype)], 0)
    y = labels.astype(jnp.float32)

    x, xc = bf(x), bf(xc)
    w_bb, w_tbb = bf(params["w_bb"]), bf(params["w_tbb"])

    feats = jnp.maximum(mm(x, w_bb) + params["b_bb"], 0.0)
    f_norm = feats / jnp.sqrt(jnp.sum(feats * feats, -1, keepdims=True) + EPS)
    w_df = params["w_df"][0]
    w_norm = w_df / jnp.sqrt(jnp.sum(w_df * w_df) + EPS)
    logits = SCALE * mm(f_norm, w_norm)
    z = logits + LOGIT_ADJ
    bce = jnp.maximum(z, 0.0) - z * y + jnp.log1p(jnp.exp(-jnp.abs(z)))
    loss_df = jnp.mean(bce)

    feats_t = jnp.maximum(mm(xc, w_tbb) + params["b_tbb"], 0.0)
    targets = mm(feats_t, params["w_tp"]) + params["b_tp"]
    proj = jnp.maximum(mm(feats, params["w_pj"]) + params["b_pj"], 0.0)
    preds = mm(proj, params["w_pr"]) + params["b_pr"]
    cos = jnp.sum(preds * targets, -1) / jnp.maximum(
        jnp.linalg.norm(preds, axis=-1) * jnp.linalg.norm(targets, axis=-1), EPS)
    mask = (y == 0.0)
    loss_ssl = jnp.sum(jnp.where(mask, cos, 0.0)) / jnp.maximum(jnp.sum(mask), 1)
    all_same = jnp.logical_or(jnp.all(labels == 0), jnp.all(labels == 1))
    loss_ssl = jnp.where(all_same, 0.0, loss_ssl)
    return loss_df, loss_ssl


# ---------------------------------------------------------------------------
if __name__ == "__main__":
    B_DF, B_SSL = 4, 4          # df batch / ssl batch  -> combined N = 8
    C, H, W = 4, 16, 16         # NCHW frames, F_IN = 1024 -> 2 K-tiles of 512
    D, P = 128, 128             # lane-dense backbone output / projection size
    F_IN = C * H * W

    key = jax.random.PRNGKey(0)
    k_par, k1, k2, k3, k4 = jax.random.split(key, 5)

    params = init_params(k_par, F_IN, D, P)

    videos_df = jax.random.normal(k1, (B_DF, C, H, W), jnp.float32)
    videos_df_clean = jax.random.normal(k2, (B_DF, C, H, W), jnp.float32)
    videos_ssl = jax.random.normal(k3, (B_SSL, C, H, W), jnp.float32)
    videos_ssl_clean = jax.random.normal(k4, (B_SSL, C, H, W), jnp.float32)
    labels_df = jnp.array([0, 1, 0, 1], dtype=jnp.int32)

    loss_df, loss_ssl = jax.jit(model_combined_forward)(
        params, videos_df, labels_df,
        videos_df_clean=videos_df_clean,
        videos_ssl=videos_ssl,
        videos_ssl_clean=videos_ssl_clean)
    jax.block_until_ready((loss_df, loss_ssl))

    ref_df, ref_ssl = _reference_forward(
        params, videos_df, labels_df, videos_df_clean, videos_ssl,
        videos_ssl_clean)
    np.testing.assert_allclose(float(loss_df), float(ref_df), rtol=2e-2, atol=2e-2)
    np.testing.assert_allclose(float(loss_ssl), float(ref_ssl), rtol=2e-2, atol=2e-2)

    # TODO(synk): hydra-instantiated backbone/projector/predictor are abstract
    # in the reference; concrete linear/MLP stand-ins are used here, and the
    # host-side "all labels same" print is replaced by a jnp.where gate.
    print("KERNEL_OK")
</pallas_src>

<mosaic_0001>
module attributes {stable_mosaic.version = 11 : i64} {
  func.func @_combined_kernel(%arg0: i32, %arg1: memref<8x512xbf16, #tpu.memory_space<vmem>>, %arg2: memref<8x512xbf16, #tpu.memory_space<vmem>>, %arg3: memref<8x1xf32, #tpu.memory_space<vmem>>, %arg4: memref<512x128xbf16, #tpu.memory_space<vmem>>, %arg5: memref<1x128xf32, #tpu.memory_space<vmem>>, %arg6: memref<1x128xf32, #tpu.memory_space<vmem>>, %arg7: memref<512x128xbf16, #tpu.memory_space<vmem>>, %arg8: memref<1x128xf32, #tpu.memory_space<vmem>>, %arg9: memref<128x128xf32, #tpu.memory_space<vmem>>, %arg10: memref<1x128xf32, #tpu.memory_space<vmem>>, %arg11: memref<128x128xf32, #tpu.memory_space<vmem>>, %arg12: memref<1x128xf32, #tpu.memory_space<vmem>>, %arg13: memref<128x128xf32, #tpu.memory_space<vmem>>, %arg14: memref<1x128xf32, #tpu.memory_space<vmem>>, %arg15: memref<2xf32, #tpu.memory_space<smem>>, %arg16: memref<8x128xf32, #tpu.memory_space<vmem>>, %arg17: memref<8x128xf32, #tpu.memory_space<vmem>>) attributes {dimension_semantics = [#tpu.dimension_semantics<arbitrary>], iteration_bounds = array<i64: 2>, scalar_prefetch = 0 : i64, scratch_operands = 2 : i64, tpu.core_type = #tpu.core_type<tc>, window_params = [{transform_indices = @transform_0, window_bounds = array<i64: 8, 512>}, {transform_indices = @transform_1, window_bounds = array<i64: 8, 512>}, {pipeline_mode = #tpu.pipeline_mode<synchronous>, transform_indices = @transform_2, window_bounds = array<i64: 8, 1>}, {transform_indices = @transform_3, window_bounds = array<i64: 512, 128>}, {pipeline_mode = #tpu.pipeline_mode<synchronous>, transform_indices = @transform_4, window_bounds = array<i64: 1, 128>}, {pipeline_mode = #tpu.pipeline_mode<synchronous>, transform_indices = @transform_5, window_bounds = array<i64: 1, 128>}, {transform_indices = @transform_6, window_bounds = array<i64: 512, 128>}, {pipeline_mode = #tpu.pipeline_mode<synchronous>, transform_indices = @transform_7, window_bounds = array<i64: 1, 128>}, {pipeline_mode = #tpu.pipeline_mode<synchronous>, transform_indices = @transform_8, window_bounds = array<i64: 128, 128>}, {pipeline_mode = #tpu.pipeline_mode<synchronous>, transform_indices = @transform_9, window_bounds = array<i64: 1, 128>}, {pipeline_mode = #tpu.pipeline_mode<synchronous>, transform_indices = @transform_10, window_bounds = array<i64: 128, 128>}, {pipeline_mode = #tpu.pipeline_mode<synchronous>, transform_indices = @transform_11, window_bounds = array<i64: 1, 128>}, {pipeline_mode = #tpu.pipeline_mode<synchronous>, transform_indices = @transform_12, window_bounds = array<i64: 128, 128>}, {pipeline_mode = #tpu.pipeline_mode<synchronous>, transform_indices = @transform_13, window_bounds = array<i64: 1, 128>}, {transform_indices = @transform_14, window_bounds = array<i64: 2>}]} {
    %c0_i32 = arith.constant 0 : i32
    %0 = arith.cmpi eq, %arg0, %c0_i32 : i32
    %1 = arith.extui %0 : i1 to i32
    %c0_i32_0 = arith.constant 0 : i32
    %2 = arith.cmpi ne, %1, %c0_i32_0 : i32
    scf.if %2 {
      %cst_18 = arith.constant 0.000000e+00 : f32
      %18 = vector.broadcast %cst_18 : f32 to vector<8x128xf32>
      %c0_19 = arith.constant 0 : index
      %c0_20 = arith.constant 0 : index
      %19 = vector.load %arg16[%c0_19, %c0_20] : memref<8x128xf32, #tpu.memory_space<vmem>>, vector<8x128xf32>
      tpu.vector_store %arg16[%c0_19, %c0_20], %18 {strides = array<i32>} : memref<8x128xf32, #tpu.memory_space<vmem>>, vector<8x128xf32>,
      %cst_21 = arith.constant 0.000000e+00 : f32
      %20 = vector.broadcast %cst_21 : f32 to vector<8x128xf32>
      %c0_22 = arith.constant 0 : index
      %c0_23 = arith.constant 0 : index
      %21 = vector.load %arg17[%c0_22, %c0_23] : memref<8x128xf32, #tpu.memory_space<vmem>>, vector<8x128xf32>
      tpu.vector_store %arg17[%c0_22, %c0_23], %20 {strides = array<i32>} : memref<8x128xf32, #tpu.memory_space<vmem>>, vector<8x128xf32>,
      %cst_24 = arith.constant 0.000000e+00 : f32
      %c0_25 = arith.constant 0 : index
      %22 = memref.load %arg15[%c0_25] : memref<2xf32, #tpu.memory_space<smem>>
      memref.store %cst_24, %arg15[%c0_25] : memref<2xf32, #tpu.memory_space<smem>>
      %cst_26 = arith.constant 0.000000e+00 : f32
      %c1 = arith.constant 1 : index
      %23 = memref.load %arg15[%c1] : memref<2xf32, #tpu.memory_space<smem>>
      memref.store %cst_26, %arg15[%c1] : memref<2xf32, #tpu.memory_space<smem>>
    } else {
    }
    %c0 = arith.constant 0 : index
    %c0_1 = arith.constant 0 : index
    %3 = vector.load %arg16[%c0, %c0_1] : memref<8x128xf32, #tpu.memory_space<vmem>>, vector<8x128xf32>
    %c0_2 = arith.constant 0 : index
    %c0_3 = arith.constant 0 : index
    %4 = vector.load %arg1[%c0_2, %c0_3] : memref<8x512xbf16, #tpu.memory_space<vmem>>, vector<8x512xbf16>
    %c0_4 = arith.constant 0 : index
    %c0_5 = arith.constant 0 : index
    %5 = vector.load %arg4[%c0_4, %c0_5] : memref<512x128xbf16, #tpu.memory_space<vmem>>, vector<512x128xbf16>
    %cst = arith.constant dense<0.000000e+00> : vector<8x128xf32>
    %6 = tpu.matmul %4, %5, %cst {dimension_numbers = #tpu.dot_dimension_numbers<[1], [0], [0], [1], [0, 0, 1, 1], [], []>} : vector<8x512xbf16>, vector<512x128xbf16>, vector<8x128xf32> -> vector<8x128xf32>
    %7 = arith.addf %3, %6 : vector<8x128xf32>
    %c0_6 = arith.constant 0 : index
    %c0_7 = arith.constant 0 : index
    %8 = vector.load %arg16[%c0_6, %c0_7] : memref<8x128xf32, #tpu.memory_space<vmem>>, vector<8x128xf32>
    tpu.vector_store %arg16[%c0_6, %c0_7], %7 {strides = array<i32>} : memref<8x128xf32, #tpu.memory_space<vmem>>, vector<8x128xf32>,
    %c0_8 = arith.constant 0 : index
    %c0_9 = arith.constant 0 : index
    %9 = vector.load %arg17[%c0_8, %c0_9] : memref<8x128xf32, #tpu.memory_space<vmem>>, vector<8x128xf32>
    %c0_10 = arith.constant 0 : index
    %c0_11 = arith.constant 0 : index
    %10 = vector.load %arg2[%c0_10, %c0_11] : memref<8x512xbf16, #tpu.memory_space<vmem>>, vector<8x512xbf16>
    %c0_12 = arith.constant 0 : index
    %c0_13 = arith.constant 0 : index
    %11 = vector.load %arg7[%c0_12, %c0_13] : memref<512x128xbf16, #tpu.memory_space<vmem>>, vector<512x128xbf16>
    %cst_14 = arith.constant dense<0.000000e+00> : vector<8x128xf32>
    %12 = tpu.matmul %10, %11, %cst_14 {dimension_numbers = #tpu.dot_dimension_numbers<[1], [0], [0], [1], [0, 0, 1, 1], [], []>} : vector<8x512xbf16>, vector<512x128xbf16>, vector<8x128xf32> -> vector<8x128xf32>
    %13 = arith.addf %9, %12 : vector<8x128xf32>
    %c0_15 = arith.constant 0 : index
    %c0_16 = arith.constant 0 : index
    %14 = vector.load %arg17[%c0_15, %c0_16] : memref<8x128xf32, #tpu.memory_space<vmem>>, vector<8x128xf32>
    tpu.vector_store %arg17[%c0_15, %c0_16], %13 {strides = array<i32>} : memref<8x128xf32, #tpu.memory_space<vmem>>, vector<8x128xf32>,
    %c1_i32 = arith.constant 1 : i32
    %15 = arith.cmpi eq, %arg0, %c1_i32 : i32
    %16 = arith.extui %15 : i1 to i32
    %c0_i32_17 = arith.constant 0 : i32
    %17 = arith.cmpi ne, %16, %c0_i32_17 : i32
    scf.if %17 {
      %c0_18 = arith.constant 0 : index
      %c0_19 = arith.constant 0 : index
      %18 = vector.load %arg3[%c0_18, %c0_19] : memref<8x1xf32, #tpu.memory_space<vmem>>, vector<8x1xf32>
      %c0_20 = arith.constant 0 : index
      %c0_21 = arith.constant 0 : index
      %19 = vector.load %arg16[%c0_20, %c0_21] : memref<8x128xf32, #tpu.memory_space<vmem>>, vector<8x128xf32>
      %c0_22 = arith.constant 0 : index
      %c0_23 = arith.constant 0 : index
      %20 = vector.load %arg5[%c0_22, %c0_23] : memref<1x128xf32, #tpu.memory_space<vmem>>, vector<1x128xf32>
      %21 = vector.broadcast %20 : vector<1x128xf32> to vector<8x128xf32>
      %22 = arith.addf %19, %21 : vector<8x128xf32>
      %cst_24 = arith.constant 0.000000e+00 : f32
      %23 = vector.broadcast %cst_24 : f32 to vector<8x128xf32>
      %24 = arith.maximumf %22, %23 : vector<8x128xf32>
      %c0_25 = arith.constant 0 : index
      %c0_26 = arith.constant 0 : index
      %25 = vector.load %arg17[%c0_25, %c0_26] : memref<8x128xf32, #tpu.memory_space<vmem>>, vector<8x128xf32>
      %c0_27 = arith.constant 0 : index
      %c0_28 = arith.constant 0 : index
      %26 = vector.load %arg8[%c0_27, %c0_28] : memref<1x128xf32, #tpu.memory_space<vmem>>, vector<1x128xf32>
      %27 = vector.broadcast %26 : vector<1x128xf32> to vector<8x128xf32>
      %28 = arith.addf %25, %27 : vector<8x128xf32>
      %cst_29 = arith.constant 0.000000e+00 : f32
      %29 = vector.broadcast %cst_29 : f32 to vector<8x128xf32>
      %30 = arith.maximumf %28, %29 : vector<8x128xf32>
      %c0_30 = arith.constant 0 : index
      %c0_31 = arith.constant 0 : index
      %31 = vector.load %arg6[%c0_30, %c0_31] : memref<1x128xf32, #tpu.memory_space<vmem>>, vector<1x128xf32>
      %32 = vector.broadcast %31 : vector<1x128xf32> to vector<8x128xf32>
      %33 = arith.mulf %24, %32 : vector<8x128xf32>
      %cst_32 = arith.constant dense<0.000000e+00> : vector<8xf32>
      %34 = vector.multi_reduction <add>, %33, %cst_32 [1] : vector<8x128xf32> to vector<8xf32>
      %35 = vector.shape_cast %34 : vector<8xf32> to vector<8x1xf32>
      %36 = arith.mulf %24, %24 : vector<8x128xf32>
      %cst_33 = arith.constant dense<0.000000e+00> : vector<8xf32>
      %37 = vector.multi_reduction <add>, %36, %cst_33 [1] : vector<8x128xf32> to vector<8xf32>
      %38 = vector.shape_cast %37 : vector<8xf32> to vector<8x1xf32>
      %cst_34 = arith.constant 9.99999993E-9 : f32
      %39 = vector.broadcast %cst_34 : f32 to vector<8x1xf32>
      %40 = arith.addf %38, %39 : vector<8x1xf32>
      %41 = math.rsqrt %40 : vector<8x1xf32>
      %42 = arith.mulf %31, %31 : vector<1x128xf32>
      %43 = vector.shape_cast %42 : vector<1x128xf32> to vector<1x1x128xf32>
      %cst_35 = arith.constant dense<0.000000e+00> : vector<1xf32>
      %44 = vector.multi_reduction <add>, %43, %cst_35 [1, 2] : vector<1x1x128xf32> to vector<1xf32>
      %45 = vector.shape_cast %44 : vector<1xf32> to vector<1x1x1xf32>
      %46 = vector.extract %45[0, 0, 0] : f32 from vector<1x1x1xf32>
      %47 = vector.broadcast %46 : f32 to vector<1x1xf32>
      %cst_36 = arith.constant 9.99999993E-9 : f32
      %48 = vector.broadcast %cst_36 : f32 to vector<1x1xf32>
      %49 = arith.addf %47, %48 : vector<1x1xf32>
      %50 = math.rsqrt %49 : vector<1x1xf32>
      %cst_37 = arith.constant 6.400000e+01 : f32
      %51 = vector.broadcast %cst_37 : f32 to vector<8x1xf32>
      %52 = arith.mulf %51, %35 : vector<8x1xf32>
      %53 = arith.mulf %52, %41 : vector<8x1xf32>
      %54 = vector.broadcast %50 : vector<1x1xf32> to vector<8x1xf32>
      %55 = arith.mulf %53, %54 : vector<8x1xf32>
      %cst_38 = arith.constant -0.405465096 : f32
      %56 = vector.broadcast %cst_38 : f32 to vector<8x1xf32>
      %57 = arith.addf %55, %56 : vector<8x1xf32>
      %cst_39 = arith.constant 0.000000e+00 : f32
      %58 = vector.broadcast %cst_39 : f32 to vector<8x1xf32>
      %59 = arith.maximumf %57, %58 : vector<8x1xf32>
      %60 = arith.mulf %57, %18 : vector<8x1xf32>
      %61 = arith.subf %59, %60 : vector<8x1xf32>
      %62 = math.absf %57 : vector<8x1xf32>
      %cst_40 = arith.constant 0.000000e+00 : f32
      %63 = vector.broadcast %cst_40 : f32 to vector<8x1xf32>
      %64 = arith.subf %63, %62 : vector<8x1xf32>
      %65 = math.exp %64 : vector<8x1xf32>
      %66 = math.log1p %65 : vector<8x1xf32>
      %67 = arith.addf %61, %66 : vector<8x1xf32>
      %68 = vector.shape_cast %67 : vector<8x1xf32> to vector<1x8x1xf32>
      %cst_41 = arith.constant dense<0.000000e+00> : vector<1xf32>
      %69 = vector.multi_reduction <add>, %68, %cst_41 [1, 2] : vector<1x8x1xf32> to vector<1xf32>
      %70 = vector.shape_cast %69 : vector<1xf32> to vector<1x1x1xf32>
      %71 = vector.extract %70[0, 0, 0] : f32 from vector<1x1x1xf32>
      %cst_42 = arith.constant 1.250000e-01 : f32
      %72 = arith.mulf %71, %cst_42 : f32
      %c0_43 = arith.constant 0 : index
      %73 = memref.load %arg15[%c0_43] : memref<2xf32, #tpu.memory_space<smem>>
      memref.store %72, %arg15[%c0_43] : memref<2xf32, #tpu.memory_space<smem>>
      %c0_44 = arith.constant 0 : index
      %c0_45 = arith.constant 0 : index
      %74 = vector.load %arg9[%c0_44, %c0_45] : memref<128x128xf32, #tpu.memory_space<vmem>>, vector<128x128xf32>
      %cst_46 = arith.constant dense<0.000000e+00> : vector<8x128xf32>
      %75 = tpu.matmul %30, %74, %cst_46 {dimension_numbers = #tpu.dot_dimension_numbers<[1], [0], [0], [1], [0, 0, 1, 1], [], []>} : vector<8x128xf32>, vector<128x128xf32>, vector<8x128xf32> -> vector<8x128xf32>
      %c0_47 = arith.constant 0 : index
      %c0_48 = arith.constant 0 : index
      %76 = vector.load %arg10[%c0_47, %c0_48] : memref<1x128xf32, #tpu.memory_space<vmem>>, vector<1x128xf32>
      %77 = vector.broadcast %76 : vector<1x128xf32> to vector<8x128xf32>
      %78 = arith.addf %75, %77 : vector<8x128xf32>
      %c0_49 = arith.constant 0 : index
      %c0_50 = arith.constant 0 : index
      %79 = vector.load %arg11[%c0_49, %c0_50] : memref<128x128xf32, #tpu.memory_space<vmem>>, vector<128x128xf32>
      %cst_51 = arith.constant dense<0.000000e+00> : vector<8x128xf32>
      %80 = tpu.matmul %24, %79, %cst_51 {dimension_numbers = #tpu.dot_dimension_numbers<[1], [0], [0], [1], [0, 0, 1, 1], [], []>} : vector<8x128xf32>, vector<128x128xf32>, vector<8x128xf32> -> vector<8x128xf32>
      %c0_52 = arith.constant 0 : index
      %c0_53 = arith.constant 0 : index
      %81 = vector.load %arg12[%c0_52, %c0_53] : memref<1x128xf32, #tpu.memory_space<vmem>>, vector<1x128xf32>
      %82 = vector.broadcast %81 : vector<1x128xf32> to vector<8x128xf32>
      %83 = arith.addf %80, %82 : vector<8x128xf32>
      %cst_54 = arith.constant 0.000000e+00 : f32
      %84 = vector.broadcast %cst_54 : f32 to vector<8x128xf32>
      %85 = arith.maximumf %83, %84 : vector<8x128xf32>
      %c0_55 = arith.constant 0 : index
      %c0_56 = arith.constant 0 : index
      %86 = vector.load %arg13[%c0_55, %c0_56] : memref<128x128xf32, #tpu.memory_space<vmem>>, vector<128x128xf32>
      %cst_57 = arith.constant dense<0.000000e+00> : vector<8x128xf32>
      %87 = tpu.matmul %85, %86, %cst_57 {dimension_numbers = #tpu.dot_dimension_numbers<[1], [0], [0], [1], [0, 0, 1, 1], [], []>} : vector<8x128xf32>, vector<128x128xf32>, vector<8x128xf32> -> vector<8x128xf32>
      %c0_58 = arith.constant 0 : index
      %c0_59 = arith.constant 0 : index
      %88 = vector.load %arg14[%c0_58, %c0_59] : memref<1x128xf32, #tpu.memory_space<vmem>>, vector<1x128xf32>
      %89 = vector.broadcast %88 : vector<1x128xf32> to vector<8x128xf32>
      %90 = arith.addf %87, %89 : vector<8x128xf32>
      %91 = arith.mulf %90, %78 : vector<8x128xf32>
      %cst_60 = arith.constant dense<0.000000e+00> : vector<8xf32>
      %92 = vector.multi_reduction <add>, %91, %cst_60 [1] : vector<8x128xf32> to vector<8xf32>
      %93 = vector.shape_cast %92 : vector<8xf32> to vector<8x1xf32>
      %94 = arith.mulf %90, %90 : vector<8x128xf32>
      %cst_61 = arith.constant dense<0.000000e+00> : vector<8xf32>
      %95 = vector.multi_reduction <add>, %94, %cst_61 [1] : vector<8x128xf32> to vector<8xf32>
      %96 = vector.shape_cast %95 : vector<8xf32> to vector<8x1xf32>
      %97 = math.sqrt %96 : vector<8x1xf32>
      %98 = arith.mulf %78, %78 : vector<8x128xf32>
      %cst_62 = arith.constant dense<0.000000e+00> : vector<8xf32>
      %99 = vector.multi_reduction <add>, %98, %cst_62 [1] : vector<8x128xf32> to vector<8xf32>
      %100 = vector.shape_cast %99 : vector<8xf32> to vector<8x1xf32>
      %101 = math.sqrt %100 : vector<8x1xf32>
      %102 = arith.mulf %97, %101 : vector<8x1xf32>
      %cst_63 = arith.constant 9.99999993E-9 : f32
      %103 = vector.broadcast %cst_63 : f32 to vector<8x1xf32>
      %104 = arith.maximumf %102, %103 : vector<8x1xf32>
      %105 = arith.divf %93, %104 : vector<8x1xf32>
      %cst_64 = arith.constant 0.000000e+00 : f32
      %106 = vector.broadcast %cst_64 : f32 to vector<8x1xf32>
      %107 = arith.cmpf oeq, %18, %106 : vector<8x1xf32>
      %108 = arith.extui %107 : vector<8x1xi1> to vector<8x1xi32>
      %109 = arith.sitofp %108 : vector<8x1xi32> to vector<8x1xf32>
      %110 = vector.shape_cast %109 : vector<8x1xf32> to vector<1x8x1xf32>
      %cst_65 = arith.constant dense<0.000000e+00> : vector<1xf32>
      %111 = vector.multi_reduction <add>, %110, %cst_65 [1, 2] : vector<1x8x1xf32> to vector<1xf32>
      %112 = vector.shape_cast %111 : vector<1xf32> to vector<1x1x1xf32>
      %113 = vector.extract %112[0, 0, 0] : f32 from vector<1x1x1xf32>
      %114 = arith.mulf %105, %109 : vector<8x1xf32>
      %115 = vector.shape_cast %114 : vector<8x1xf32> to vector<1x8x1xf32>
      %cst_66 = arith.constant dense<0.000000e+00> : vector<1xf32>
      %116 = vector.multi_reduction <add>, %115, %cst_66 [1, 2] : vector<1x8x1xf32> to vector<1xf32>
      %117 = vector.shape_cast %116 : vector<1xf32> to vector<1x1x1xf32>
      %118 = vector.extract %117[0, 0, 0] : f32 from vector<1x1x1xf32>
      %cst_67 = arith.constant 1.000000e+00 : f32
      %119 = arith.maximumf %113, %cst_67 : f32
      %120 = arith.divf %118, %119 : f32
      %c1 = arith.constant 1 : index
      %121 = memref.load %arg15[%c1] : memref<2xf32, #tpu.memory_space<smem>>
      memref.store %120, %arg15[%c1] : memref<2xf32, #tpu.memory_space<smem>>
    } else {
    }
    return
  }
  func.func @transform_0(%arg0: i32) -> (i32, i32) {
    %c0_i32 = arith.constant 0 : i32
    %c0_i32_0 = arith.constant 0 : i32
    return %c0_i32, %arg0 : i32, i32
  }
  func.func @transform_1(%arg0: i32) -> (i32, i32) {
    %c0_i32 = arith.constant 0 : i32
    %c0_i32_0 = arith.constant 0 : i32
    return %c0_i32, %arg0 : i32, i32
  }
  func.func @transform_2(%arg0: i32) -> (i32, i32) {
    %c0_i32 = arith.constant 0 : i32
    %c0_i32_0 = arith.constant 0 : i32
    %c0_i32_1 = arith.constant 0 : i32
    return %c0_i32, %c0_i32_0 : i32, i32
  }
  func.func @transform_3(%arg0: i32) -> (i32, i32) {
    %c0_i32 = arith.constant 0 : i32
    %c0_i32_0 = arith.constant 0 : i32
    return %arg0, %c0_i32 : i32, i32
  }
  func.func @transform_4(%arg0: i32) -> (i32, i32) {
    %c0_i32 = arith.constant 0 : i32
    %c0_i32_0 = arith.constant 0 : i32
    %c0_i32_1 = arith.constant 0 : i32
    return %c0_i32, %c0_i32_0 : i32, i32
  }
  func.func @transform_5(%arg0: i32) -> (i32, i32) {
    %c0_i32 = arith.constant 0 : i32
    %c0_i32_0 = arith.constant 0 : i32
    %c0_i32_1 = arith.constant 0 : i32
    return %c0_i32, %c0_i32_0 : i32, i32
  }
  func.func @transform_6(%arg0: i32) -> (i32, i32) {
    %c0_i32 = arith.constant 0 : i32
    %c0_i32_0 = arith.constant 0 : i32
    return %arg0, %c0_i32 : i32, i32
  }
  func.func @transform_7(%arg0: i32) -> (i32, i32) {
    %c0_i32 = arith.constant 0 : i32
    %c0_i32_0 = arith.constant 0 : i32
    %c0_i32_1 = arith.constant 0 : i32
    return %c0_i32, %c0_i32_0 : i32, i32
  }
  func.func @transform_8(%arg0: i32) -> (i32, i32) {
    %c0_i32 = arith.constant 0 : i32
    %c0_i32_0 = arith.constant 0 : i32
    %c0_i32_1 = arith.constant 0 : i32
    return %c0_i32, %c0_i32_0 : i32, i32
  }
  func.func @transform_9(%arg0: i32) -> (i32, i32) {
    %c0_i32 = arith.constant 0 : i32
    %c0_i32_0 = arith.constant 0 : i32
    %c0_i32_1 = arith.constant 0 : i32
    return %c0_i32, %c0_i32_0 : i32, i32
  }
  func.func @transform_10(%arg0: i32) -> (i32, i32) {
    %c0_i32 = arith.constant 0 : i32
    %c0_i32_0 = arith.constant 0 : i32
    %c0_i32_1 = arith.constant 0 : i32
    return %c0_i32, %c0_i32_0 : i32, i32
  }
  func.func @transform_11(%arg0: i32) -> (i32, i32) {
    %c0_i32 = arith.constant 0 : i32
    %c0_i32_0 = arith.constant 0 : i32
    %c0_i32_1 = arith.constant 0 : i32
    return %c0_i32, %c0_i32_0 : i32, i32
  }
  func.func @transform_12(%arg0: i32) -> (i32, i32) {
    %c0_i32 = arith.constant 0 : i32
    %c0_i32_0 = arith.constant 0 : i32
    %c0_i32_1 = arith.constant 0 : i32
    return %c0_i32, %c0_i32_0 : i32, i32
  }
  func.func @transform_13(%arg0: i32) -> (i32, i32) {
    %c0_i32 = arith.constant 0 : i32
    %c0_i32_0 = arith.constant 0 : i32
    %c0_i32_1 = arith.constant 0 : i32
    return %c0_i32, %c0_i32_0 : i32, i32
  }
  func.func @transform_14(%arg0: i32) -> i32 {
    %c0_i32 = arith.constant 0 : i32
    %c0_i32_0 = arith.constant 0 : i32
    return %c0_i32 : i32
  }
}

</mosaic_0001>

<llo_original>
// kernel: model_combined_forward.1
$region0: #{model_combined_forward.1}
  #allocation0 [shape = 'u32[]', space=smem, size = 0x4, offset = 0x4, fixed_abs, tag = 'smem constant byte address 0x4 - core index']
  #allocation1 [shape = 'u32[144,128]{1,0:T(1,128)}', space=vmem, size = 0x12000, scoped, tag = 'internal scratch']
  #allocation2 [shape = 'f32[8,128]{1,0:T(8,128)}', space=vmem, size = 0x1000, scoped, tag = 'scratch operand']
  #allocation3 [shape = 'f32[8,128]{1,0:T(8,128)}', space=vmem, size = 0x1000, scoped, tag = 'scratch operand']
  %s0 = inlined_call_operand.vmem [shape: bf16[8,1024], index: 0, kind: input, shape index: {}]
  %s1 = inlined_call_operand.vmem [shape: bf16[8,1024], index: 1, kind: input, shape index: {}]
  %s2 = inlined_call_operand.vmem [shape: f32[8,1], index: 2, kind: input, shape index: {}]
  %s3 = inlined_call_operand.vmem [shape: bf16[1024,128], index: 3, kind: input, shape index: {}]
  %s4 = inlined_call_operand.vmem [shape: f32[1,128], index: 4, kind: input, shape index: {}]
  %s5 = inlined_call_operand.vmem [shape: f32[1,128], index: 5, kind: input, shape index: {}]
  %s6 = inlined_call_operand.vmem [shape: bf16[1024,128], index: 6, kind: input, shape index: {}]
  %s7 = inlined_call_operand.vmem [shape: f32[1,128], index: 7, kind: input, shape index: {}]
  %s8 = inlined_call_operand.vmem [shape: f32[128,128], index: 8, kind: input, shape index: {}]
  %s9 = inlined_call_operand.vmem [shape: f32[1,128], index: 9, kind: input, shape index: {}]
  %s10 = inlined_call_operand.vmem [shape: f32[128,128], index: 10, kind: input, shape index: {}]
  %s11 = inlined_call_operand.vmem [shape: f32[1,128], index: 11, kind: input, shape index: {}]
  %s12 = inlined_call_operand.vmem [shape: f32[128,128], index: 12, kind: input, shape index: {}]
  %s13 = inlined_call_operand.vmem [shape: f32[1,128], index: 13, kind: input, shape index: {}]
  %s14 = inlined_call_operand.vmem [shape: f32[2], index: 14, kind: output, shape index: {}]
  %s15 = sld [smem:[#allocation0]]
  $region97: #{model_combined_forward.1} parent=0
    _
  %s17 = ssub.s32 1, %s15
  %s18 = scalar_select 0, %s17, %s15
  $region1: #{model_combined_forward.1} parent=0
    #allocation4 [shape = 'u8[512]{0}', space=smem, size = 0x200, scoped, tag = 'output window, operand 0, single buffered']
    #allocation5 [shape = 's32[2]{0}', space=sflag, size = 0x8, scoped, tag = 'scoped memory for model_combined_forward.1']
    %19 = vsyncpa [#allocation5], 0
    loop: start=0, step=1, limit=4
    $region2: #{model_combined_forward.1} parent=1 // loop_pre_header
      _
    $region3: #{model_combined_forward.1} parent=1 // loop_header
      %s21 = sphi 0, %s25
      %p22 = scmp.ge.s32.totalorder %s21, 4
      %s31 = sphi 0, %s33
      %s34 = sphi 0, %s31
      %s35 = sphi 0, %s34
      %s51 = sphi 0, %s35
      %s57 = sphi 0, %s59
      %s60 = sphi 0, %s57
      %s61 = sphi 0, %s60
      %s77 = sphi 0, %s61
      %s81 = sphi 0, %s81
      %s83 = sphi 0, %s81
      %s84 = sphi 0, %s83
      %s98 = sphi 0, %s84
      %s104 = sphi 0, %s106
      %s107 = sphi 0, %s104
      %s108 = sphi 0, %s107
      %s124 = sphi 0, %s108
      %s128 = sphi 0, %s128
      %s130 = sphi 0, %s128
      %s131 = sphi 0, %s130
      %s145 = sphi 0, %s131
      %s149 = sphi 0, %s149
      %s151 = sphi 0, %s149
      %s152 = sphi 0, %s151
      %s166 = sphi 0, %s152
      %s172 = sphi 0, %s174
      %s175 = sphi 0, %s172
      %s176 = sphi 0, %s175
      %s192 = sphi 0, %s176
      %s196 = sphi 0, %s196
      %s198 = sphi 0, %s196
      %s199 = sphi 0, %s198
      %s213 = sphi 0, %s199
      %s217 = sphi 0, %s217
      %s219 = sphi 0, %s217
      %s220 = sphi 0, %s219
      %s234 = sphi 0, %s220
      %s238 = sphi 0, %s238
      %s240 = sphi 0, %s238
      %s241 = sphi 0, %s240
      %s255 = sphi 0, %s241
      %s259 = sphi 0, %s259
      %s261 = sphi 0, %s259
      %s262 = sphi 0, %s261
      %s276 = sphi 0, %s262
      %s280 = sphi 0, %s280
      %s282 = sphi 0, %s280
      %s283 = sphi 0, %s282
      %s297 = sphi 0, %s283
      %s301 = sphi 0, %s301
      %s303 = sphi 0, %s301
      %s304 = sphi 0, %s303
      %s318 = sphi 0, %s304
      %s322 = sphi 0, %s322
      %s324 = sphi 0, %s322
      %s325 = sphi 0, %s324
      %s339 = sphi 0, %s325
      %s343 = sphi 0, %s343
      %s345 = sphi 0, %s343
      %s346 = sphi 0, %s345
      %s360 = sphi 0, %s346
    $region4: #{model_combined_forward.1} parent=1 // loop_header_branch
      %24 = sbr.rel (%p22) target = $region8
    $region5: #{model_combined_forward.1} parent=1 // loop_body
      %s26 = ssub.s32 %s21, 1
      %s27 = ssub.s32 %s21, 2
      %s28 = sadd.s32 %s21, 1
      %s29 = ssub.s32 %s21, %s28
      %p30 = scmp.eq.s32.totalorder %s29, 0
      %s32 = sadd.s32 %s31, 1
      %s33 = scalar_select %p30, %s31, %s32
      %p36 = pneg %p30
      %p37 = scmp.eq.s32.totalorder %s21, 1
      %p38 = por %p36, %p37
      %p39 = scmp.ne.s32.totalorder %s31, %s34
      %p40 = scmp.eq.s32.totalorder %s21, 0
      %p41 = por %p39, %p40
      %p42 = scmp.ne.s32.totalorder %s31, %s34
      %p43 = scmp.eq.s32.totalorder %s26, 1
      %p44 = por %p42, %p43
      %p45 = scmp.ne.s32.totalorder %s34, %s35
      %p46 = scmp.eq.s32.totalorder %s26, 0
      %p47 = por %p45, %p46
      %p48 = scmp.ne.s32.totalorder %s34, %s35
      %p49 = scmp.eq.s32.totalorder %s27, 1
      %p50 = por %p48, %p49
      %p52 = scmp.ne.s32.totalorder %s35, %s51
      %p53 = scmp.eq.s32.totalorder %s27, 0
      %p54 = por %p52, %p53
      %s55 = ssub.s32 %s21, %s28
      %p56 = scmp.eq.s32.totalorder %s55, 0
      %s58 = sadd.s32 %s57, 1
      %s59 = scalar_select %p56, %s57, %s58
      %p62 = pneg %p56
      %p63 = scmp.eq.s32.totalorder %s21, 1
      %p64 = por %p62, %p63
      %p65 = scmp.ne.s32.totalorder %s57, %s60
      %p66 = scmp.eq.s32.totalorder %s21, 0
      %p67 = por %p65, %p66
      %p68 = scmp.ne.s32.totalorder %s57, %s60
      %p69 = scmp.eq.s32.totalorder %s26, 1
      %p70 = por %p68, %p69
      %p71 = scmp.ne.s32.totalorder %s60, %s61
      %p72 = scmp.eq.s32.totalorder %s26, 0
      %p73 = por %p71, %p72
      %p74 = scmp.ne.s32.totalorder %s60, %s61
      %p75 = scmp.eq.s32.totalorder %s27, 1
      %p76 = por %p74, %p75
      %p78 = scmp.ne.s32.totalorder %s61, %s77
      %p79 = scmp.eq.s32.totalorder %s27, 0
      %p80 = por %p78, %p79
      %s82 = sadd.s32 %s81, 1
      %p85 = scmp.eq.s32.totalorder %s21, 1
      %p86 = scmp.ne.s32.totalorder %s81, %s83
      %p87 = scmp.eq.s32.totalorder %s21, 0
      %p88 = por %p86, %p87
      %p89 = scmp.ne.s32.totalorder %s81, %s83
      %p90 = scmp.eq.s32.totalorder %s26, 1
      %p91 = por %p89, %p90
      %p92 = scmp.ne.s32.totalorder %s83, %s84
      %p93 = scmp.eq.s32.totalorder %s26, 0
      %p94 = por %p92, %p93
      %p95 = scmp.ne.s32.totalorder %s83, %s84
      %p96 = scmp.eq.s32.totalorder %s27, 1
      %p97 = por %p95, %p96
      %p99 = scmp.ne.s32.totalorder %s84, %s98
      %p100 = scmp.eq.s32.totalorder %s27, 0
      %p101 = por %p99, %p100
      %s102 = ssub.s32 %s21, %s28
      %p103 = scmp.eq.s32.totalorder %s102, 0
      %s105 = sadd.s32 %s104, 1
      %s106 = scalar_select %p103, %s104, %s105
      %p109 = pneg %p103
      %p110 = scmp.eq.s32.totalorder %s21, 1
      %p111 = por %p109, %p110
      %p112 = scmp.ne.s32.totalorder %s104, %s107
      %p113 = scmp.eq.s32.totalorder %s21, 0
      %p114 = por %p112, %p113
      %p115 = scmp.ne.s32.totalorder %s104, %s107
      %p116 = scmp.eq.s32.totalorder %s26, 1
      %p117 = por %p115, %p116
      %p118 = scmp.ne.s32.totalorder %s107, %s108
      %p119 = scmp.eq.s32.totalorder %s26, 0
      %p120 = por %p118, %p119
      %p121 = scmp.ne.s32.totalorder %s107, %s108
      %p122 = scmp.eq.s32.totalorder %s27, 1
      %p123 = por %p121, %p122
      %p125 = scmp.ne.s32.totalorder %s108, %s124
      %p126 = scmp.eq.s32.totalorder %s27, 0
      %p127 = por %p125, %p126
      %s129 = sadd.s32 %s128, 1
      %p132 = scmp.eq.s32.totalorder %s21, 1
      %p133 = scmp.ne.s32.totalorder %s128, %s130
      %p134 = scmp.eq.s32.totalorder %s21, 0
      %p135 = por %p133, %p134
      %p136 = scmp.ne.s32.totalorder %s128, %s130
      %p137 = scmp.eq.s32.totalorder %s26, 1
      %p138 = por %p136, %p137
      %p139 = scmp.ne.s32.totalorder %s130, %s131
      %p140 = scmp.eq.s32.totalorder %s26, 0
      %p141 = por %p139, %p140
      %p142 = scmp.ne.s32.totalorder %s130, %s131
      %p143 = scmp.eq.s32.totalorder %s27, 1
      %p144 = por %p142, %p143
      %p146 = scmp.ne.s32.totalorder %s131, %s145
      %p147 = scmp.eq.s32.totalorder %s27, 0
      %p148 = por %p146, %p147
      %s150 = sadd.s32 %s149, 1
      %p153 = scmp.eq.s32.totalorder %s21, 1
      %p154 = scmp.ne.s32.totalorder %s149, %s151
      %p155 = scmp.eq.s32.totalorder %s21, 0
      %p156 = por %p154, %p155
      %p157 = scmp.ne.s32.totalorder %s149, %s151
      %p158 = scmp.eq.s32.totalorder %s26, 1
      %p159 = por %p157, %p158
      %p160 = scmp.ne.s32.totalorder %s151, %s152
      %p161 = scmp.eq.s32.totalorder %s26, 0
      %p162 = por %p160, %p161
      %p163 = scmp.ne.s32.totalorder %s151, %s152
      %p164 = scmp.eq.s32.totalorder %s27, 1
      %p165 = por %p163, %p164
      %p167 = scmp.ne.s32.totalorder %s152, %s166
      %p168 = scmp.eq.s32.totalorder %s27, 0
      %p169 = por %p167, %p168
      %s170 = ssub.s32 %s21, %s28
      %p171 = scmp.eq.s32.totalorder %s170, 0
      %s173 = sadd.s32 %s172, 1
      %s174 = scalar_select %p171, %s172, %s173
      %p177 = pneg %p171
      %p178 = scmp.eq.s32.totalorder %s21, 1
      %p179 = por %p177, %p178
      %p180 = scmp.ne.s32.totalorder %s172, %s175
      %p181 = scmp.eq.s32.totalorder %s21, 0
      %p182 = por %p180, %p181
      %p183 = scmp.ne.s32.totalorder %s172, %s175
      %p184 = scmp.eq.s32.totalorder %s26, 1
      %p185 = por %p183, %p184
      %p186 = scmp.ne.s32.totalorder %s175, %s176
      %p187 = scmp.eq.s32.totalorder %s26, 0
      %p188 = por %p186, %p187
      %p189 = scmp.ne.s32.totalorder %s175, %s176
      %p190 = scmp.eq.s32.totalorder %s27, 1
      %p191 = por %p189, %p190
      %p193 = scmp.ne.s32.totalorder %s176, %s192
      %p194 = scmp.eq.s32.totalorder %s27, 0
      %p195 = por %p193, %p194
      %s197 = sadd.s32 %s196, 1
      %p200 = scmp.eq.s32.totalorder %s21, 1
      %p201 = scmp.ne.s32.totalorder %s196, %s198
      %p202 = scmp.eq.s32.totalorder %s21, 0
      %p203 = por %p201, %p202
      %p204 = scmp.ne.s32.totalorder %s196, %s198
      %p205 = scmp.eq.s32.totalorder %s26, 1
      %p206 = por %p204, %p205
      %p207 = scmp.ne.s32.totalorder %s198, %s199
      %p208 = scmp.eq.s32.totalorder %s26, 0
      %p209 = por %p207, %p208
      %p210 = scmp.ne.s32.totalorder %s198, %s199
      %p211 = scmp.eq.s32.totalorder %s27, 1
      %p212 = por %p210, %p211
      %p214 = scmp.ne.s32.totalorder %s199, %s213
      %p215 = scmp.eq.s32.totalorder %s27, 0
      %p216 = por %p214, %p215
      %s218 = sadd.s32 %s217, 1
      %p221 = scmp.eq.s32.totalorder %s21, 1
      %p222 = scmp.ne.s32.totalorder %s217, %s219
      %p223 = scmp.eq.s32.totalorder %s21, 0
      %p224 = por %p222, %p223
      %p225 = scmp.ne.s32.totalorder %s217, %s219
      %p226 = scmp.eq.s32.totalorder %s26, 1
      %p227 = por %p225, %p226
      %p228 = scmp.ne.s32.totalorder %s219, %s220
      %p229 = scmp.eq.s32.totalorder %s26, 0
      %p230 = por %p228, %p229
      %p231 = scmp.ne.s32.totalorder %s219, %s220
      %p232 = scmp.eq.s32.totalorder %s27, 1
      %p233 = por %p231, %p232
      %p235 = scmp.ne.s32.totalorder %s220, %s234
      %p236 = scmp.eq.s32.totalorder %s27, 0
      %p237 = por %p235, %p236
      %s239 = sadd.s32 %s238, 1
      %p242 = scmp.eq.s32.totalorder %s21, 1
      %p243 = scmp.ne.s32.totalorder %s238, %s240
      %p244 = scmp.eq.s32.totalorder %s21, 0
      %p245 = por %p243, %p244
      %p246 = scmp.ne.s32.totalorder %s238, %s240
      %p247 = scmp.eq.s32.totalorder %s26, 1
      %p248 = por %p246, %p247
      %p249 = scmp.ne.s32.totalorder %s240, %s241
      %p250 = scmp.eq.s32.totalorder %s26, 0
      %p251 = por %p249, %p250
      %p252 = scmp.ne.s32.totalorder %s240, %s241
      %p253 = scmp.eq.s32.totalorder %s27, 1
      %p254 = por %p252, %p253
      %p256 = scmp.ne.s32.totalorder %s241, %s255
      %p257 = scmp.eq.s32.totalorder %s27, 0
      %p258 = por %p256, %p257
      %s260 = sadd.s32 %s259, 1
      %p263 = scmp.eq.s32.totalorder %s21, 1
      %p264 = scmp.ne.s32.totalorder %s259, %s261
      %p265 = scmp.eq.s32.totalorder %s21, 0
      %p266 = por %p264, %p265
      %p267 = scmp.ne.s32.totalorder %s259, %s261
      %p268 = scmp.eq.s32.totalorder %s26, 1
      %p269 = por %p267, %p268
      %p270 = scmp.ne.s32.totalorder %s261, %s262
      %p271 = scmp.eq.s32.totalorder %s26, 0
      %p272 = por %p270, %p271
      %p273 = scmp.ne.s32.totalorder %s261, %s262
      %p274 = scmp.eq.s32.totalorder %s27, 1
      %p275 = por %p273, %p274
      %p277 = scmp.ne.s32.totalorder %s262, %s276
      %p278 = scmp.eq.s32.totalorder %s27, 0
      %p279 = por %p277, %p278
      %s281 = sadd.s32 %s280, 1
      %p284 = scmp.eq.s32.totalorder %s21, 1
      %p285 = scmp.ne.s32.totalorder %s280, %s282
      %p286 = scmp.eq.s32.totalorder %s21, 0
      %p287 = por %p285, %p286
      %p288 = scmp.ne.s32.totalorder %s280, %s282
      %p289 = scmp.eq.s32.totalorder %s26, 1
      %p290 = por %p288, %p289
      %p291 = scmp.ne.s32.totalorder %s282, %s283
      %p292 = scmp.eq.s32.totalorder %s26, 0
      %p293 = por %p291, %p292
      %p294 = scmp.ne.s32.totalorder %s282, %s283
      %p295 = scmp.eq.s32.totalorder %s27, 1
      %p296 = por %p294, %p295
      %p298 = scmp.ne.s32.totalorder %s283, %s297
      %p299 = scmp.eq.s32.totalorder %s27, 0
      %p300 = por %p298, %p299
      %s302 = sadd.s32 %s301, 1
      %p305 = scmp.eq.s32.totalorder %s21, 1
      %p306 = scmp.ne.s32.totalorder %s301, %s303
      %p307 = scmp.eq.s32.totalorder %s21, 0
      %p308 = por %p306, %p307
      %p309 = scmp.ne.s32.totalorder %s301, %s303
      %p310 = scmp.eq.s32.totalorder %s26, 1
      %p311 = por %p309, %p310
      %p312 = scmp.ne.s32.totalorder %s303, %s304
      %p313 = scmp.eq.s32.totalorder %s26, 0
      %p314 = por %p312, %p313
      %p315 = scmp.ne.s32.totalorder %s303, %s304
      %p316 = scmp.eq.s32.totalorder %s27, 1
      %p317 = por %p315, %p316
      %p319 = scmp.ne.s32.totalorder %s304, %s318
      %p320 = scmp.eq.s32.totalorder %s27, 0
      %p321 = por %p319, %p320
      %s323 = sadd.s32 %s322, 1
      %p326 = scmp.eq.s32.totalorder %s21, 1
      %p327 = scmp.ne.s32.totalorder %s322, %s324
      %p328 = scmp.eq.s32.totalorder %s21, 0
      %p329 = por %p327, %p328
      %p330 = scmp.ne.s32.totalorder %s322, %s324
      %p331 = scmp.eq.s32.totalorder %s26, 1
      %p332 = por %p330, %p331
      %p333 = scmp.ne.s32.totalorder %s324, %s325
      %p334 = scmp.eq.s32.totalorder %s26, 0
      %p335 = por %p333, %p334
      %p336 = scmp.ne.s32.totalorder %s324, %s325
      %p337 = scmp.eq.s32.totalorder %s27, 1
      %p338 = por %p336, %p337
      %p340 = scmp.ne.s32.totalorder %s325, %s339
      %p341 = scmp.eq.s32.totalorder %s27, 0
      %p342 = por %p340, %p341
      %s344 = sadd.s32 %s343, 1
      %p347 = scmp.eq.s32.totalorder %s21, 1
      %p348 = scmp.ne.s32.totalorder %s343, %s345
      %p349 = scmp.eq.s32.totalorder %s21, 0
      %p350 = por %p348, %p349
      %p351 = scmp.ne.s32.totalorder %s343, %s345
      %p352 = scmp.eq.s32.totalorder %s26, 1
      %p353 = por %p351, %p352
      %p354 = scmp.ne.s32.totalorder %s345, %s346
      %p355 = scmp.eq.s32.totalorder %s26, 0
      %p356 = por %p354, %p355
      %p357 = scmp.ne.s32.totalorder %s345, %s346
      %p358 = scmp.eq.s32.totalorder %s27, 1
      %p359 = por %p357, %p358
      %p361 = scmp.ne.s32.totalorder %s346, %s360
      %p362 = scmp.eq.s32.totalorder %s27, 0
      %p363 = por %p361, %p362
      %p364 = scmp.le.s32.totalorder 1, %s21
      %p365 = scmp.lt.s32.totalorder %s21, 3
      %p366 = pnand %p364, %p365
      %p367 = pneg %p366
      // Predicated region
      $region9: #{model_combined_forward.1} parent=5 // pred_check
        _
      $region10: #{model_combined_forward.1} parent=5 // pred_check_branch
        %369 = sbr.rel (%p366) target = $region12
      $region11: #{model_combined_forward.1} parent=5 // pred_region
        %s370 = ssub.s32 %s21, 1
        // Predicated region
        $region13: #{model_combined_forward.1} parent=11 // pred_check
          %p371 = pneg %p94
        $region14: #{model_combined_forward.1} parent=11 // pred_check_branch
          %373 = sbr.rel (%p371) target = $region16
        $region15: #{model_combined_forward.1} parent=11 // pred_region
          _
        $region16: #{model_combined_forward.1} parent=11 // pred_fallthru
          _
        // Predicated region
        $region17: #{model_combined_forward.1} parent=11 // pred_check
          %p374 = pneg %p141
        $region18: #{model_combined_forward.1} parent=11 // pred_check_branch
          %376 = sbr.rel (%p374) target = $region20
        $region19: #{model_combined_forward.1} parent=11 // pred_region
          _
        $region20: #{model_combined_forward.1} parent=11 // pred_fallthru
          _
        // Predicated region
        $region21: #{model_combined_forward.1} parent=11 // pred_check
          %p377 = pneg %p162
        $region22: #{model_combined_forward.1} parent=11 // pred_check_branch
          %379 = sbr.rel (%p377) target = $region24
        $region23: #{model_combined_forward.1} parent=11 // pred_region
          _
        $region24: #{model_combined_forward.1} parent=11 // pred_fallthru
          _
        // Predicated region
        $region25: #{model_combined_forward.1} parent=11 // pred_check
          %p380 = pneg %p209
        $region26: #{model_combined_forward.1} parent=11 // pred_check_branch
          %382 = sbr.rel (%p380) target = $region28
        $region27: #{model_combined_forward.1} parent=11 // pred_region
          _
        $region28: #{model_combined_forward.1} parent=11 // pred_fallthru
          _
        // Predicated region
        $region29: #{model_combined_forward.1} parent=11 // pred_check
          %p383 = pneg %p230
        $region30: #{model_combined_forward.1} parent=11 // pred_check_branch
          %385 = sbr.rel (%p383) target = $region32
        $region31: #{model_combined_forward.1} parent=11 // pred_region
          _
        $region32: #{model_combined_forward.1} parent=11 // pred_fallthru
          _
        // Predicated region
        $region33: #{model_combined_forward.1} parent=11 // pred_check
          %p386 = pneg %p251
        $region34: #{model_combined_forward.1} parent=11 // pred_check_branch
          %388 = sbr.rel (%p386) target = $region36
        $region35: #{model_combined_forward.1} parent=11 // pred_region
          _
        $region36: #{model_combined_forward.1} parent=11 // pred_fallthru
          _
        // Predicated region
        $region37: #{model_combined_forward.1} parent=11 // pred_check
          %p389 = pneg %p272
        $region38: #{model_combined_forward.1} parent=11 // pred_check_branch
          %391 = sbr.rel (%p389) target = $region40
        $region39: #{model_combined_forward.1} parent=11 // pred_region
          _
        $region40: #{model_combined_forward.1} parent=11 // pred_fallthru
          _
        // Predicated region
        $region41: #{model_combined_forward.1} parent=11 // pred_check
          %p392 = pneg %p293
        $region42: #{model_combined_forward.1} parent=11 // pred_check_branch
          %394 = sbr.rel (%p392) target = $region44
        $region43: #{model_combined_forward.1} parent=11 // pred_region
          _
        $region44: #{model_combined_forward.1} parent=11 // pred_fallthru
          _
        // Predicated region
        $region45: #{model_combined_forward.1} parent=11 // pred_check
          %p395 = pneg %p314
        $region46: #{model_combined_forward.1} parent=11 // pred_check_branch
          %397 = sbr.rel (%p395) target = $region48
        $region47: #{model_combined_forward.1} parent=11 // pred_region
          _
        $region48: #{model_combined_forward.1} parent=11 // pred_fallthru
          _
        // Predicated region
        $region49: #{model_combined_forward.1} parent=11 // pred_check
          %p398 = pneg %p335
        $region50: #{model_combined_forward.1} parent=11 // pred_check_branch
          %400 = sbr.rel (%p398) target = $region52
        $region51: #{model_combined_forward.1} parent=11 // pred_region
          _
        $region52: #{model_combined_forward.1} parent=11 // pred_fallthru
          _
      $region12: #{model_combined_forward.1} parent=5 // pred_fallthru
        _
      %p401 = scmp.lt.s32.totalorder %s21, 2
      // Predicated region
      $region53: #{model_combined_forward.1} parent=5 // pred_check
        %p402 = pneg %p401
      $region54: #{model_combined_forward.1} parent=5 // pred_check_branch
        %404 = sbr.rel (%p402) target = $region56
      $region55: #{model_combined_forward.1} parent=5 // pred_region
        // Predicated region
        $region57: #{model_combined_forward.1} parent=55 // pred_check
          %p405 = pneg %p41
        $region58: #{model_combined_forward.1} parent=55 // pred_check_branch
          %407 = sbr.rel (%p405) target = $region60
        $region59: #{model_combined_forward.1} parent=55 // pred_region
          %s408 = smul.u32 4, %s21
          %p409 = scmp.lt.s32.totalorder %s408, 7
          %s410 = scalar_select %p409, %s408, 7
          %s411 = smul.addr %s410, 4
          %s412 = scalar_lea.vmem %s0, %s411
          %s413 = smul.u32 4, %s21
        $region60: #{model_combined_forward.1} parent=55 // pred_fallthru
          _
        // Predicated region
        $region61: #{model_combined_forward.1} parent=55 // pred_check
          %p414 = pneg %p67
        $region62: #{model_combined_forward.1} parent=55 // pred_check_branch
          %416 = sbr.rel (%p414) target = $region64
        $region63: #{model_combined_forward.1} parent=55 // pred_region
          %s417 = smul.u32 4, %s21
          %p418 = scmp.lt.s32.totalorder %s417, 7
          %s419 = scalar_select %p418, %s417, 7
          %s420 = smul.addr %s419, 4
          %s421 = scalar_lea.vmem %s1, %s420
          %s422 = smul.u32 4, %s21
        $region64: #{model_combined_forward.1} parent=55 // pred_fallthru
          _
        // Predicated region
        $region65: #{model_combined_forward.1} parent=55 // pred_check
          %p423 = pneg %p114
        $region66: #{model_combined_forward.1} parent=55 // pred_check_branch
          %425 = sbr.rel (%p423) target = $region68
        $region67: #{model_combined_forward.1} parent=55 // pred_region
          %s426 = smul.u32 64, %s21
          %p427 = scmp.lt.s32.totalorder %s426, 127
          %s428 = scalar_select %p427, %s426, 127
          %s429 = smul.addr %s428, 4
          %s430 = scalar_lea.vmem %s3, %s429
          %s431 = smul.u32 64, %s21
        $region68: #{model_combined_forward.1} parent=55 // pred_fallthru
          _
        // Predicated region
        $region69: #{model_combined_forward.1} parent=55 // pred_check
          %p432 = pneg %p182
        $region70: #{model_combined_forward.1} parent=55 // pred_check_branch
          %434 = sbr.rel (%p432) target = $region72
        $region71: #{model_combined_forward.1} parent=55 // pred_region
          %s435 = smul.u32 64, %s21
          %p436 = scmp.lt.s32.totalorder %s435, 127
          %s437 = scalar_select %p436, %s435, 127
          %s438 = smul.addr %s437, 4
          %s439 = scalar_lea.vmem %s6, %s438
          %s440 = smul.u32 64, %s21
        $region72: #{model_combined_forward.1} parent=55 // pred_fallthru
          _
      $region56: #{model_combined_forward.1} parent=5 // pred_fallthru
        _
      %p441 = scmp.le.s32.totalorder 1, %s21
      %p442 = scmp.lt.s32.totalorder %s21, 3
      %p443 = pnand %p441, %p442
      %p444 = pneg %p443
      // Predicated region
      $region73: #{model_combined_forward.1} parent=5 // pred_check
        _
      $region74: #{model_combined_forward.1} parent=5 // pred_check_branch
        %446 = sbr.rel (%p443) target = $region76
      $region75: #{model_combined_forward.1} parent=5 // pred_region
        %s447 = ssub.s32 %s21, 1
        %s448 = smul.u32 4, %s26
        %p449 = scmp.lt.s32.totalorder %s448, 7
        %s450 = scalar_select %p449, %s448, 7
        %s451 = smul.addr %s450, 4
        %s452 = scalar_lea.vmem %s0, %s451
        %p453 = pneg %p47
        %p454 = pneg %p44
        %s455 = smul.u32 4, %s26
        %p456 = scmp.lt.s32.totalorder %s455, 7
        %s457 = scalar_select %p456, %s455, 7
        %s458 = smul.addr %s457, 4
        %s459 = scalar_lea.vmem %s1, %s458
        %p460 = pneg %p73
        %p461 = pneg %p70
        %p462 = pneg %p94
        %p463 = pneg %p91
        %s464 = smul.u32 64, %s26
        %p465 = scmp.lt.s32.totalorder %s464, 127
        %s466 = scalar_select %p465, %s464, 127
        %s467 = smul.addr %s466, 4
        %s468 = scalar_lea.vmem %s3, %s467
        %p469 = pneg %p120
        %p470 = pneg %p117
        %p471 = pneg %p141
        %p472 = pneg %p138
        %p473 = pneg %p162
        %p474 = pneg %p159
        %s475 = smul.u32 64, %s26
        %p476 = scmp.lt.s32.totalorder %s475, 127
        %s477 = scalar_select %p476, %s475, 127
        %s478 = smul.addr %s477, 4
        %s479 = scalar_lea.vmem %s6, %s478
        %p480 = pneg %p188
        %p481 = pneg %p185
        %p482 = pneg %p209
        %p483 = pneg %p206
        %p484 = pneg %p230
        %p485 = pneg %p227
        %p486 = pneg %p251
        %p487 = pneg %p248
        %p488 = pneg %p272
        %p489 = pneg %p269
        %p490 = pneg %p293
        %p491 = pneg %p290
        %p492 = pneg %p314
        %p493 = pneg %p311
        %p494 = pneg %p335
        %p495 = pneg %p332
        %p496 = pneg %p356
        %p497 = pneg %p353
        %s498 = smul.u32 4, %s26
        %p499 = scmp.lt.s32.totalorder %s498, 7
        %s500 = scalar_select %p499, %s498, 7
        %s501 = smul.addr %s500, 4
        %s502 = scalar_lea.vmem %s0, %s501
        %s503 = smul.u32 4, %s26
        %s504 = smul.u32 4, %s26
        %p505 = scmp.lt.s32.totalorder %s504, 7
        %s506 = scalar_select %p505, %s504, 7
        %s507 = smul.addr %s506, 4
        %s508 = scalar_lea.vmem %s1, %s507
        %s509 = smul.u32 4, %s26
        %s510 = smul.u32 64, %s26
        %p511 = scmp.lt.s32.totalorder %s510, 127
        %s512 = scalar_select %p511, %s510, 127
        %s513 = smul.addr %s512, 4
        %s514 = scalar_lea.vmem %s3, %s513
        %s515 = smul.u32 64, %s26
        %s516 = smul.u32 64, %s26
        %p517 = scmp.lt.s32.totalorder %s516, 127
        %s518 = scalar_select %p517, %s516, 127
        %s519 = smul.addr %s518, 4
        %s520 = scalar_lea.vmem %s6, %s519
        %s521 = smul.u32 64, %s26
        %p523 = scmp.eq.s32.totalorder %s26, 0
        // Predicated region
        $region77: #{model_combined_forward.1} parent=75 // pred_check
          %p524 = pneg %p523
        $region78: #{model_combined_forward.1} parent=75 // pred_check_branch
          %526 = sbr.rel (%p524) target = $region80
        $region79: #{model_combined_forward.1} parent=75 // pred_region
          %527 = vst [vmem:[#allocation2] sm:$0xff] 0.0
          %528 = vst [vmem:[#allocation3] sm:$0xff] 0.0
          %s529 = scalar_lea.smem [#allocation4], 0
          %530 = sst [smem:[%s529]] 0.0
          %s531 = scalar_lea.smem [#allocation4], 1
          %532 = sst [smem:[%s531]] 0.0
        $region80: #{model_combined_forward.1} parent=75 // pred_fallthru
          _
        %v533 = vld [vmem:[#allocation2] sm:$0xff]
        %v534 = vld [vmem:[%s502] sm:$0xff]
        %v535 = vld [vmem:[%s502 + $0x8] sm:$0xff]
        %v536 = vld [vmem:[%s514] sm:$0xf]
        %v537 = vld [vmem:[%s514 + $0x4] sm:$0xf]
        %v538 = vld [vmem:[%s514 + $0x8] sm:$0xf]
        %v539 = vld [vmem:[%s514 + $0xc] sm:$0xf]
        %v540 = vld [vmem:[%s514 + $0x10] sm:$0xf]
        %v541 = vld [vmem:[%s514 + $0x14] sm:$0xf]
        %v542 = vld [vmem:[%s514 + $0x18] sm:$0xf]
        %v543 = vld [vmem:[%s514 + $0x1c] sm:$0xf]
        %v544 = vld [vmem:[%s514 + $0x20] sm:$0xf]
        %v545 = vld [vmem:[%s514 + $0x24] sm:$0xf]
        %v546 = vld [vmem:[%s514 + $0x28] sm:$0xf]
        %v547 = vld [vmem:[%s514 + $0x2c] sm:$0xf]
        %v548 = vld [vmem:[%s514 + $0x30] sm:$0xf]
        %v549 = vld [vmem:[%s514 + $0x34] sm:$0xf]
        %v550 = vld [vmem:[%s514 + $0x38] sm:$0xf]
        %v551 = vld [vmem:[%s514 + $0x3c] sm:$0xf]
        %v552 = vld [vmem:[%s514 + $0x40] sm:$0xf]
        %v553 = vld [vmem:[%s514 + $0x44] sm:$0xf]
        %v554 = vld [vmem:[%s514 + $0x48] sm:$0xf]
        %v555 = vld [vmem:[%s514 + $0x4c] sm:$0xf]
        %v556 = vld [vmem:[%s514 + $0x50] sm:$0xf]
        %v557 = vld [vmem:[%s514 + $0x54] sm:$0xf]
        %v558 = vld [vmem:[%s514 + $0x58] sm:$0xf]
        %v559 = vld [vmem:[%s514 + $0x5c] sm:$0xf]
        %v560 = vld [vmem:[%s514 + $0x60] sm:$0xf]
        %v561 = vld [vmem:[%s514 + $0x64] sm:$0xf]
        %v562 = vld [vmem:[%s514 + $0x68] sm:$0xf]
        %v563 = vld [vmem:[%s514 + $0x6c] sm:$0xf]
        %v564 = vld [vmem:[%s514 + $0x70] sm:$0xf]
        %v565 = vld [vmem:[%s514 + $0x74] sm:$0xf]
        %v566 = vld [vmem:[%s514 + $0x78] sm:$0xf]
        %v567 = vld [vmem:[%s514 + $0x7c] sm:$0xf]
        %v568 = vld [vmem:[%s514 + $0x80] sm:$0xf]
        %v569 = vld [vmem:[%s514 + $0x84] sm:$0xf]
        %v570 = vld [vmem:[%s514 + $0x88] sm:$0xf]
        %v571 = vld [vmem:[%s514 + $0x8c] sm:$0xf]
        %v572 = vld [vmem:[%s514 + $0x90] sm:$0xf]
        %v573 = vld [vmem:[%s514 + $0x94] sm:$0xf]
        %v574 = vld [vmem:[%s514 + $0x98] sm:$0xf]
        %v575 = vld [vmem:[%s514 + $0x9c] sm:$0xf]
        %v576 = vld [vmem:[%s514 + $0xa0] sm:$0xf]
        %v577 = vld [vmem:[%s514 + $0xa4] sm:$0xf]
        %v578 = vld [vmem:[%s514 + $0xa8] sm:$0xf]
        %v579 = vld [vmem:[%s514 + $0xac] sm:$0xf]
        %v580 = vld [vmem:[%s514 + $0xb0] sm:$0xf]
        %v581 = vld [vmem:[%s514 + $0xb4] sm:$0xf]
        %v582 = vld [vmem:[%s514 + $0xb8] sm:$0xf]
        %v583 = vld [vmem:[%s514 + $0xbc] sm:$0xf]
        %v584 = vld [vmem:[%s514 + $0xc0] sm:$0xf]
        %v585 = vld [vmem:[%s514 + $0xc4] sm:$0xf]
        %v586 = vld [vmem:[%s514 + $0xc8] sm:$0xf]
        %v587 = vld [vmem:[%s514 + $0xcc] sm:$0xf]
        %v588 = vld [vmem:[%s514 + $0xd0] sm:$0xf]
        %v589 = vld [vmem:[%s514 + $0xd4] sm:$0xf]
        %v590 = vld [vmem:[%s514 + $0xd8] sm:$0xf]
        %v591 = vld [vmem:[%s514 + $0xdc] sm:$0xf]
        %v592 = vld [vmem:[%s514 + $0xe0] sm:$0xf]
        %v593 = vld [vmem:[%s514 + $0xe4] sm:$0xf]
        %v594 = vld [vmem:[%s514 + $0xe8] sm:$0xf]
        %v595 = vld [vmem:[%s514 + $0xec] sm:$0xf]
        %v596 = vld [vmem:[%s514 + $0xf0] sm:$0xf]
        %v597 = vld [vmem:[%s514 + $0xf4] sm:$0xf]
        %v598 = vld [vmem:[%s514 + $0xf8] sm:$0xf]
        %v599 = vld [vmem:[%s514 + $0xfc] sm:$0xf]
        %v602 = vunpack.c.l.b16 %v534
        %v603 = vunpack.c.h.b16 %v534
        %v604 = vunpack.c.l.b16 %v535
        %v605 = vunpack.c.h.b16 %v535
        %v606 = vpack.c.b16 %v602, %v602
        %v607 = vpack.c.b16 %v603, %v603
        %v608 = vpack.c.b16 %v604, %v604
        %v609 = vpack.c.b16 %v605, %v605
        %v678 = vunpack.c.l.b16 %v536
        %v679 = vunpack.c.l.b16 %v537
        %v680 = vunpack.c.l.b16 %v538
        %v681 = vunpack.c.l.b16 %v539
        %v682 = vunpack.c.l.b16 %v540
        %v683 = vunpack.c.l.b16 %v541
        %v684 = vunpack.c.l.b16 %v542
        %v685 = vunpack.c.l.b16 %v543
        %v686 = vunpack.c.l.b16 %v544
        %v687 = vunpack.c.l.b16 %v545
        %v688 = vunpack.c.l.b16 %v546
        %v689 = vunpack.c.l.b16 %v547
        %v690 = vunpack.c.l.b16 %v548
        %v691 = vunpack.c.l.b16 %v549
        %v692 = vunpack.c.l.b16 %v550
        %v693 = vunpack.c.l.b16 %v551
        %v694 = vunpack.c.l.b16 %v552
        %v695 = vunpack.c.l.b16 %v553
        %v696 = vunpack.c.l.b16 %v554
        %v697 = vunpack.c.l.b16 %v555
        %v698 = vunpack.c.l.b16 %v556
        %v699 = vunpack.c.l.b16 %v557
        %v700 = vunpack.c.l.b16 %v558
        %v701 = vunpack.c.l.b16 %v559
        %v702 = vunpack.c.l.b16 %v560
        %v703 = vunpack.c.l.b16 %v561
        %v704 = vunpack.c.l.b16 %v562
        %v705 = vunpack.c.l.b16 %v563
        %v706 = vunpack.c.l.b16 %v564
        %v707 = vunpack.c.l.b16 %v565
        %v708 = vunpack.c.l.b16 %v566
        %v709 = vunpack.c.l.b16 %v567
        %v710 = vunpack.c.l.b16 %v568
        %v711 = vunpack.c.l.b16 %v569
        %v712 = vunpack.c.l.b16 %v570
        %v713 = vunpack.c.l.b16 %v571
        %v714 = vunpack.c.l.b16 %v572
        %v715 = vunpack.c.l.b16 %v573
        %v716 = vunpack.c.l.b16 %v574
        %v717 = vunpack.c.l.b16 %v575
        %v718 = vunpack.c.l.b16 %v576
        %v719 = vunpack.c.l.b16 %v577
        %v720 = vunpack.c.l.b16 %v578
        %v721 = vunpack.c.l.b16 %v579
        %v722 = vunpack.c.l.b16 %v580
        %v723 = vunpack.c.l.b16 %v581
        %v724 = vunpack.c.l.b16 %v582
        %v725 = vunpack.c.l.b16 %v583
        %v726 = vunpack.c.l.b16 %v584
        %v727 = vunpack.c.l.b16 %v585
        %v728 = vunpack.c.l.b16 %v586
        %v729 = vunpack.c.l.b16 %v587
        %v730 = vunpack.c.l.b16 %v588
        %v731 = vunpack.c.l.b16 %v589
        %v732 = vunpack.c.l.b16 %v590
        %v733 = vunpack.c.l.b16 %v591
        %v734 = vunpack.c.l.b16 %v592
        %v735 = vunpack.c.l.b16 %v593
        %v736 = vunpack.c.l.b16 %v594
        %v737 = vunpack.c.l.b16 %v595
        %v738 = vunpack.c.l.b16 %v596
        %v739 = vunpack.c.l.b16 %v597
        %v740 = vunpack.c.l.b16 %v598
        %v741 = vunpack.c.l.b16 %v599
        %v742 = vpack.c.b16 %v679, %v678
        %v743 = vpack.c.b16 %v681, %v680
        %v744 = vpack.c.b16 %v683, %v682
        %v745 = vpack.c.b16 %v685, %v684
        %v746 = vpack.c.b16 %v687, %v686
        %v747 = vpack.c.b16 %v689, %v688
        %v748 = vpack.c.b16 %v691, %v690
        %v749 = vpack.c.b16 %v693, %v692
        %v750 = vpack.c.b16 %v695, %v694
        %v751 = vpack.c.b16 %v697, %v696
        %v752 = vpack.c.b16 %v699, %v698
        %v753 = vpack.c.b16 %v701, %v700
        %v754 = vpack.c.b16 %v703, %v702
        %v755 = vpack.c.b16 %v705, %v704
        %v756 = vpack.c.b16 %v707, %v706
        %v757 = vpack.c.b16 %v709, %v708
        %v758 = vpack.c.b16 %v711, %v710
        %v759 = vpack.c.b16 %v713, %v712
        %v760 = vpack.c.b16 %v715, %v714
        %v761 = vpack.c.b16 %v717, %v716
        %v762 = vpack.c.b16 %v719, %v718
        %v763 = vpack.c.b16 %v721, %v720
        %v764 = vpack.c.b16 %v723, %v722
        %v765 = vpack.c.b16 %v725, %v724
        %v766 = vpack.c.b16 %v727, %v726
        %v767 = vpack.c.b16 %v729, %v728
        %v768 = vpack.c.b16 %v731, %v730
        %v769 = vpack.c.b16 %v733, %v732
        %v770 = vpack.c.b16 %v735, %v734
        %v771 = vpack.c.b16 %v737, %v736
        %v772 = vpack.c.b16 %v739, %v738
        %v773 = vpack.c.b16 %v741, %v740
        %806 = vmatprep.subr.bf16.mxu0 0
        %807 = vmatpush1.bf16.msra.mxu0 %v742
        %808 = vmatprep.subr.bf16.mxu0 0
        %809 = vmatpush1.bf16.msra.mxu0 %v743
        %810 = vmatprep.subr.bf16.mxu0 0
        %811 = vmatpush1.bf16.msra.mxu0 %v744
        %812 = vmatprep.subr.bf16.mxu0 0
        %813 = vmatpush1.bf16.msra.mxu0 %v745
        %814 = vmatprep.subr.bf16.mxu0 0
        %815 = vmatpush1.bf16.msra.mxu0 %v746
        %816 = vmatprep.subr.bf16.mxu0 0
        %817 = vmatpush1.bf16.msra.mxu0 %v747
        %818 = vmatprep.subr.bf16.mxu0 0
        %819 = vmatpush1.bf16.msra.mxu0 %v748
        %820 = vmatprep.subr.bf16.mxu0 0
        %821 = vmatpush1.bf16.msra.mxu0 %v749
        %822 = vmatprep.subr.bf16.mxu0 0
        %823 = vmatpush1.bf16.msra.mxu0 %v750
        %824 = vmatprep.subr.bf16.mxu0 0
        %825 = vmatpush1.bf16.msra.mxu0 %v751
        %826 = vmatprep.subr.bf16.mxu0 0
        %827 = vmatpush1.bf16.msra.mxu0 %v752
        %828 = vmatprep.subr.bf16.mxu0 0
        %829 = vmatpush1.bf16.msra.mxu0 %v753
        %830 = vmatprep.subr.bf16.mxu0 0
        %831 = vmatpush1.bf16.msra.mxu0 %v754
        %832 = vmatprep.subr.bf16.mxu0 0
        %833 = vmatpush1.bf16.msra.mxu0 %v755
        %834 = vmatprep.subr.bf16.mxu0 0
        %835 = vmatpush1.bf16.msra.mxu0 %v756
        %836 = vmatprep.subr.bf16.mxu0 0
        %837 = vmatpush1.bf16.msra.mxu0 %v757
        %838 = vmatprep.mubr.bf16.mxu0 %v607
        %839 = vmatmul.mubr.bf16.gmra.mrb[0].mxu0 %v606
        %v840 = vpop.f32.mrb[0].mxu0
        %v841 = vadd.f32 0.0, %v840
        %v842 = vpop.f32.mrb[0].mxu0
        %v843 = vpop.f32.mrb[0].mxu0
        %v844 = vpop.f32.mrb[0].mxu0
        %845 = vdwg.mxu0
        %846 = vmatprep.subr.bf16.mxu0 0
        %847 = vmatpush1.bf16.msra.mxu0 %v758
        %848 = vmatprep.subr.bf16.mxu0 0
        %849 = vmatpush1.bf16.msra.mxu0 %v759
        %850 = vmatprep.subr.bf16.mxu0 0
        %851 = vmatpush1.bf16.msra.mxu0 %v760
        %852 = vmatprep.subr.bf16.mxu0 0
        %853 = vmatpush1.bf16.msra.mxu0 %v761
        %854 = vmatprep.subr.bf16.mxu0 0
        %855 = vmatpush1.bf16.msra.mxu0 %v762
        %856 = vmatprep.subr.bf16.mxu0 0
        %857 = vmatpush1.bf16.msra.mxu0 %v763
        %858 = vmatprep.subr.bf16.mxu0 0
        %859 = vmatpush1.bf16.msra.mxu0 %v764
        %860 = vmatprep.subr.bf16.mxu0 0
        %861 = vmatpush1.bf16.msra.mxu0 %v765
        %862 = vmatprep.subr.bf16.mxu0 0
        %863 = vmatpush1.bf16.msra.mxu0 %v766
        %864 = vmatprep.subr.bf16.mxu0 0
        %865 = vmatpush1.bf16.msra.mxu0 %v767
        %866 = vmatprep.subr.bf16.mxu0 0
        %867 = vmatpush1.bf16.msra.mxu0 %v768
        %868 = vmatprep.subr.bf16.mxu0 0
        %869 = vmatpush1.bf16.msra.mxu0 %v769
        %870 = vmatprep.subr.bf16.mxu0 0
        %871 = vmatpush1.bf16.msra.mxu0 %v770
        %872 = vmatprep.subr.bf16.mxu0 0
        %873 = vmatpush1.bf16.msra.mxu0 %v771
        %874 = vmatprep.subr.bf16.mxu0 0
        %875 = vmatpush1.bf16.msra.mxu0 %v772
        %876 = vmatprep.subr.bf16.mxu0 0
        %877 = vmatpush1.bf16.msra.mxu0 %v773
        %878 = vmatprep.mubr.bf16.mxu0 %v609
        %879 = vmatmul.mubr.bf16.gmra.mrb[0].mxu0 %v608
        %v880 = vpop.f32.mrb[0].mxu0
        %v881 = vadd.f32 %v841, %v880
        %v882 = vpop.f32.mrb[0].mxu0
        %v883 = vpop.f32.mrb[0].mxu0
        %v884 = vpop.f32.mrb[0].mxu0
        %885 = vdwg.mxu0
        %v886 = vadd.f32 %v533, %v881
        %887 = vst [vmem:[#allocation2] sm:$0xff] %v886
        %v888 = vld [vmem:[#allocation3] sm:$0xff]
        %v889 = vld [vmem:[%s508] sm:$0xff]
        %v890 = vld [vmem:[%s508 + $0x8] sm:$0xff]
        %v891 = vld [vmem:[%s520] sm:$0xf]
        %v892 = vld [vmem:[%s520 + $0x4] sm:$0xf]
        %v893 = vld [vmem:[%s520 + $0x8] sm:$0xf]
        %v894 = vld [vmem:[%s520 + $0xc] sm:$0xf]
        %v895 = vld [vmem:[%s520 + $0x10] sm:$0xf]
        %v896 = vld [vmem:[%s520 + $0x14] sm:$0xf]
        %v897 = vld [vmem:[%s520 + $0x18] sm:$0xf]
        %v898 = vld [vmem:[%s520 + $0x1c] sm:$0xf]
        %v899 = vld [vmem:[%s520 + $0x20] sm:$0xf]
        %v900 = vld [vmem:[%s520 + $0x24] sm:$0xf]
        %v901 = vld [vmem:[%s520 + $0x28] sm:$0xf]
        %v902 = vld [vmem:[%s520 + $0x2c] sm:$0xf]
        %v903 = vld [vmem:[%s520 + $0x30] sm:$0xf]
        %v904 = vld [vmem:[%s520 + $0x34] sm:$0xf]
        %v905 = vld [vmem:[%s520 + $0x38] sm:$0xf]
        %v906 = vld [vmem:[%s520 + $0x3c] sm:$0xf]
        %v907 = vld [vmem:[%s520 + $0x40] sm:$0xf]
        %v908 = vld [vmem:[%s520 + $0x44] sm:$0xf]
        %v909 = vld [vmem:[%s520 + $0x48] sm:$0xf]
        %v910 = vld [vmem:[%s520 + $0x4c] sm:$0xf]
        %v911 = vld [vmem:[%s520 + $0x50] sm:$0xf]
        %v912 = vld [vmem:[%s520 + $0x54] sm:$0xf]
        %v913 = vld [vmem:[%s520 + $0x58] sm:$0xf]
        %v914 = vld [vmem:[%s520 + $0x5c] sm:$0xf]
        %v915 = vld [vmem:[%s520 + $0x60] sm:$0xf]
        %v916 = vld [vmem:[%s520 + $0x64] sm:$0xf]
        %v917 = vld [vmem:[%s520 + $0x68] sm:$0xf]
        %v918 = vld [vmem:[%s520 + $0x6c] sm:$0xf]
        %v919 = vld [vmem:[%s520 + $0x70] sm:$0xf]
        %v920 = vld [vmem:[%s520 + $0x74] sm:$0xf]
        %v921 = vld [vmem:[%s520 + $0x78] sm:$0xf]
        %v922 = vld [vmem:[%s520 + $0x7c] sm:$0xf]
        %v923 = vld [vmem:[%s520 + $0x80] sm:$0xf]
        %v924 = vld [vmem:[%s520 + $0x84] sm:$0xf]
        %v925 = vld [vmem:[%s520 + $0x88] sm:$0xf]
        %v926 = vld [vmem:[%s520 + $0x8c] sm:$0xf]
        %v927 = vld [vmem:[%s520 + $0x90] sm:$0xf]
        %v928 = vld [vmem:[%s520 + $0x94] sm:$0xf]
        %v929 = vld [vmem:[%s520 + $0x98] sm:$0xf]
        %v930 = vld [vmem:[%s520 + $0x9c] sm:$0xf]
        %v931 = vld [vmem:[%s520 + $0xa0] sm:$0xf]
        %v932 = vld [vmem:[%s520 + $0xa4] sm:$0xf]
        %v933 = vld [vmem:[%s520 + $0xa8] sm:$0xf]
        %v934 = vld [vmem:[%s520 + $0xac] sm:$0xf]
        %v935 = vld [vmem:[%s520 + $0xb0] sm:$0xf]
        %v936 = vld [vmem:[%s520 + $0xb4] sm:$0xf]
        %v937 = vld [vmem:[%s520 + $0xb8] sm:$0xf]
        %v938 = vld [vmem:[%s520 + $0xbc] sm:$0xf]
        %v939 = vld [vmem:[%s520 + $0xc0] sm:$0xf]
        %v940 = vld [vmem:[%s520 + $0xc4] sm:$0xf]
        %v941 = vld [vmem:[%s520 + $0xc8] sm:$0xf]
        %v942 = vld [vmem:[%s520 + $0xcc] sm:$0xf]
        %v943 = vld [vmem:[%s520 + $0xd0] sm:$0xf]
        %v944 = vld [vmem:[%s520 + $0xd4] sm:$0xf]
        %v945 = vld [vmem:[%s520 + $0xd8] sm:$0xf]
        %v946 = vld [vmem:[%s520 + $0xdc] sm:$0xf]
        %v947 = vld [vmem:[%s520 + $0xe0] sm:$0xf]
        %v948 = vld [vmem:[%s520 + $0xe4] sm:$0xf]
        %v949 = vld [vmem:[%s520 + $0xe8] sm:$0xf]
        %v950 = vld [vmem:[%s520 + $0xec] sm:$0xf]
        %v951 = vld [vmem:[%s520 + $0xf0] sm:$0xf]
        %v952 = vld [vmem:[%s520 + $0xf4] sm:$0xf]
        %v953 = vld [vmem:[%s520 + $0xf8] sm:$0xf]
        %v954 = vld [vmem:[%s520 + $0xfc] sm:$0xf]
        %v957 = vunpack.c.l.b16 %v889
        %v958 = vunpack.c.h.b16 %v889
        %v959 = vunpack.c.l.b16 %v890
        %v960 = vunpack.c.h.b16 %v890
        %v961 = vpack.c.b16 %v957, %v957
        %v962 = vpack.c.b16 %v958, %v958
        %v963 = vpack.c.b16 %v959, %v959
        %v964 = vpack.c.b16 %v960, %v960
        %v1033 = vunpack.c.l.b16 %v891
        %v1034 = vunpack.c.l.b16 %v892
        %v1035 = vunpack.c.l.b16 %v893
        %v1036 = vunpack.c.l.b16 %v894
        %v1037 = vunpack.c.l.b16 %v895
        %v1038 = vunpack.c.l.b16 %v896
        %v1039 = vunpack.c.l.b16 %v897
        %v1040 = vunpack.c.l.b16 %v898
        %v1041 = vunpack.c.l.b16 %v899
        %v1042 = vunpack.c.l.b16 %v900
        %v1043 = vunpack.c.l.b16 %v901
        %v1044 = vunpack.c.l.b16 %v902
        %v1045 = vunpack.c.l.b16 %v903
        %v1046 = vunpack.c.l.b16 %v904
        %v1047 = vunpack.c.l.b16 %v905
        %v1048 = vunpack.c.l.b16 %v906
        %v1049 = vunpack.c.l.b16 %v907
        %v1050 = vunpack.c.l.b16 %v908
        %v1051 = vunpack.c.l.b16 %v909
        %v1052 = vunpack.c.l.b16 %v910
        %v1053 = vunpack.c.l.b16 %v911
        %v1054 = vunpack.c.l.b16 %v912
        %v1055 = vunpack.c.l.b16 %v913
        %v1056 = vunpack.c.l.b16 %v914
        %v1057 = vunpack.c.l.b16 %v915
        %v1058 = vunpack.c.l.b16 %v916
        %v1059 = vunpack.c.l.b16 %v917
        %v1060 = vunpack.c.l.b16 %v918
        %v1061 = vunpack.c.l.b16 %v919
        %v1062 = vunpack.c.l.b16 %v920
        %v1063 = vunpack.c.l.b16 %v921
        %v1064 = vunpack.c.l.b16 %v922
        %v1065 = vunpack.c.l.b16 %v923
        %v1066 = vunpack.c.l.b16 %v924
        %v1067 = vunpack.c.l.b16 %v925
        %v1068 = vunpack.c.l.b16 %v926
        %v1069 = vunpack.c.l.b16 %v927
        %v1070 = vunpack.c.l.b16 %v928
        %v1071 = vunpack.c.l.b16 %v929
        %v1072 = vunpack.c.l.b16 %v930
        %v1073 = vunpack.c.l.b16 %v931
        %v1074 = vunpack.c.l.b16 %v932
        %v1075 = vunpack.c.l.b16 %v933
        %v1076 = vunpack.c.l.b16 %v934
        %v1077 = vunpack.c.l.b16 %v935
        %v1078 = vunpack.c.l.b16 %v936
        %v1079 = vunpack.c.l.b16 %v937
        %v1080 = vunpack.c.l.b16 %v938
        %v1081 = vunpack.c.l.b16 %v939
        %v1082 = vunpack.c.l.b16 %v940
        %v1083 = vunpack.c.l.b16 %v941
        %v1084 = vunpack.c.l.b16 %v942
        %v1085 = vunpack.c.l.b16 %v943
        %v1086 = vunpack.c.l.b16 %v944
        %v1087 = vunpack.c.l.b16 %v945
        %v1088 = vunpack.c.l.b16 %v946
        %v1089 = vunpack.c.l.b16 %v947
        %v1090 = vunpack.c.l.b16 %v948
        %v1091 = vunpack.c.l.b16 %v949
        %v1092 = vunpack.c.l.b16 %v950
        %v1093 = vunpack.c.l.b16 %v951
        %v1094 = vunpack.c.l.b16 %v952
        %v1095 = vunpack.c.l.b16 %v953
        %v1096 = vunpack.c.l.b16 %v954
        %v1097 = vpack.c.b16 %v1034, %v1033
        %v1098 = vpack.c.b16 %v1036, %v1035
        %v1099 = vpack.c.b16 %v1038, %v1037
        %v1100 = vpack.c.b16 %v1040, %v1039
        %v1101 = vpack.c.b16 %v1042, %v1041
        %v1102 = vpack.c.b16 %v1044, %v1043
        %v1103 = vpack.c.b16 %v1046, %v1045
        %v1104 = vpack.c.b16 %v1048, %v1047
        %v1105 = vpack.c.b16 %v1050, %v1049
        %v1106 = vpack.c.b16 %v1052, %v1051
        %v1107 = vpack.c.b16 %v1054, %v1053
        %v1108 = vpack.c.b16 %v1056, %v1055
        %v1109 = vpack.c.b16 %v1058, %v1057
        %v1110 = vpack.c.b16 %v1060, %v1059
        %v1111 = vpack.c.b16 %v1062, %v1061
        %v1112 = vpack.c.b16 %v1064, %v1063
        %v1113 = vpack.c.b16 %v1066, %v1065
        %v1114 = vpack.c.b16 %v1068, %v1067
        %v1115 = vpack.c.b16 %v1070, %v1069
        %v1116 = vpack.c.b16 %v1072, %v1071
        %v1117 = vpack.c.b16 %v1074, %v1073
        %v1118 = vpack.c.b16 %v1076, %v1075
        %v1119 = vpack.c.b16 %v1078, %v1077
        %v1120 = vpack.c.b16 %v1080, %v1079
        %v1121 = vpack.c.b16 %v1082, %v1081
        %v1122 = vpack.c.b16 %v1084, %v1083
        %v1123 = vpack.c.b16 %v1086, %v1085
        %v1124 = vpack.c.b16 %v1088, %v1087
        %v1125 = vpack.c.b16 %v1090, %v1089
        %v1126 = vpack.c.b16 %v1092, %v1091
        %v1127 = vpack.c.b16 %v1094, %v1093
        %v1128 = vpack.c.b16 %v1096, %v1095
        %1161 = vmatprep.subr.bf16.mxu0 0
        %1162 = vmatpush1.bf16.msra.mxu0 %v1097
        %1163 = vmatprep.subr.bf16.mxu0 0
        %1164 = vmatpush1.bf16.msra.mxu0 %v1098
        %1165 = vmatprep.subr.bf16.mxu0 0
        %1166 = vmatpush1.bf16.msra.mxu0 %v1099
        %1167 = vmatprep.subr.bf16.mxu0 0
        %1168 = vmatpush1.bf16.msra.mxu0 %v1100
        %1169 = vmatprep.subr.bf16.mxu0 0
        %1170 = vmatpush1.bf16.msra.mxu0 %v1101
        %1171 = vmatprep.subr.bf16.mxu0 0
        %1172 = vmatpush1.bf16.msra.mxu0 %v1102
        %1173 = vmatprep.subr.bf16.mxu0 0
        %1174 = vmatpush1.bf16.msra.mxu0 %v1103
        %1175 = vmatprep.subr.bf16.mxu0 0
        %1176 = vmatpush1.bf16.msra.mxu0 %v1104
        %1177 = vmatprep.subr.bf16.mxu0 0
        %1178 = vmatpush1.bf16.msra.mxu0 %v1105
        %1179 = vmatprep.subr.bf16.mxu0 0
        %1180 = vmatpush1.bf16.msra.mxu0 %v1106
        %1181 = vmatprep.subr.bf16.mxu0 0
        %1182 = vmatpush1.bf16.msra.mxu0 %v1107
        %1183 = vmatprep.subr.bf16.mxu0 0
        %1184 = vmatpush1.bf16.msra.mxu0 %v1108
        %1185 = vmatprep.subr.bf16.mxu0 0
        %1186 = vmatpush1.bf16.msra.mxu0 %v1109
        %1187 = vmatprep.subr.bf16.mxu0 0
        %1188 = vmatpush1.bf16.msra.mxu0 %v1110
        %1189 = vmatprep.subr.bf16.mxu0 0
        %1190 = vmatpush1.bf16.msra.mxu0 %v1111
        %1191 = vmatprep.subr.bf16.mxu0 0
        %1192 = vmatpush1.bf16.msra.mxu0 %v1112
        %1193 = vmatprep.mubr.bf16.mxu0 %v962
        %1194 = vmatmul.mubr.bf16.gmra.mrb[0].mxu0 %v961
        %v1195 = vpop.f32.mrb[0].mxu0
        %v1196 = vadd.f32 0.0, %v1195
        %v1197 = vpop.f32.mrb[0].mxu0
        %v1198 = vpop.f32.mrb[0].mxu0
        %v1199 = vpop.f32.mrb[0].mxu0
        %1200 = vdwg.mxu0
        %1201 = vmatprep.subr.bf16.mxu0 0
        %1202 = vmatpush1.bf16.msra.mxu0 %v1113
        %1203 = vmatprep.subr.bf16.mxu0 0
        %1204 = vmatpush1.bf16.msra.mxu0 %v1114
        %1205 = vmatprep.subr.bf16.mxu0 0
        %1206 = vmatpush1.bf16.msra.mxu0 %v1115
        %1207 = vmatprep.subr.bf16.mxu0 0
        %1208 = vmatpush1.bf16.msra.mxu0 %v1116
        %1209 = vmatprep.subr.bf16.mxu0 0
        %1210 = vmatpush1.bf16.msra.mxu0 %v1117
        %1211 = vmatprep.subr.bf16.mxu0 0
        %1212 = vmatpush1.bf16.msra.mxu0 %v1118
        %1213 = vmatprep.subr.bf16.mxu0 0
        %1214 = vmatpush1.bf16.msra.mxu0 %v1119
        %1215 = vmatprep.subr.bf16.mxu0 0
        %1216 = vmatpush1.bf16.msra.mxu0 %v1120
        %1217 = vmatprep.subr.bf16.mxu0 0
        %1218 = vmatpush1.bf16.msra.mxu0 %v1121
        %1219 = vmatprep.subr.bf16.mxu0 0
        %1220 = vmatpush1.bf16.msra.mxu0 %v1122
        %1221 = vmatprep.subr.bf16.mxu0 0
        %1222 = vmatpush1.bf16.msra.mxu0 %v1123
        %1223 = vmatprep.subr.bf16.mxu0 0
        %1224 = vmatpush1.bf16.msra.mxu0 %v1124
        %1225 = vmatprep.subr.bf16.mxu0 0
        %1226 = vmatpush1.bf16.msra.mxu0 %v1125
        %1227 = vmatprep.subr.bf16.mxu0 0
        %1228 = vmatpush1.bf16.msra.mxu0 %v1126
        %1229 = vmatprep.subr.bf16.mxu0 0
        %1230 = vmatpush1.bf16.msra.mxu0 %v1127
        %1231 = vmatprep.subr.bf16.mxu0 0
        %1232 = vmatpush1.bf16.msra.mxu0 %v1128
        %1233 = vmatprep.mubr.bf16.mxu0 %v964
        %1234 = vmatmul.mubr.bf16.gmra.mrb[0].mxu0 %v963
        %v1235 = vpop.f32.mrb[0].mxu0
        %v1236 = vadd.f32 %v1196, %v1235
        %v1237 = vpop.f32.mrb[0].mxu0
        %v1238 = vpop.f32.mrb[0].mxu0
        %v1239 = vpop.f32.mrb[0].mxu0
        %1240 = vdwg.mxu0
        %v1241 = vadd.f32 %v888, %v1236
        %1242 = vst [vmem:[#allocation3] sm:$0xff] %v1241
        %p1243 = scmp.eq.s32.totalorder %s26, 1
        // Predicated region
        $region81: #{model_combined_forward.1} parent=75 // pred_check
          %p1244 = pneg %p1243
        $region82: #{model_combined_forward.1} parent=75 // pred_check_branch
          %1246 = sbr.rel (%p1244) target = $region84
        $region83: #{model_combined_forward.1} parent=75 // pred_region
          %v1247 = vld [vmem:[%s2] sm:$0xff]
          %v1248 = vld [vmem:[#allocation2] sm:$0xff]
          %v1249 = vld [vmem:[%s4] sm:$0x1]
          %v1251 = vlaneseq
          %v1252 = vshrl.u32 %v1251, 7
          %v1253 = vsub.s32 0, %v1252
          %v1254 = vrot.slane %v1249, %v1253
          %v1256 = vadd.f32 %v1248, %v1254
          %v1257 = vmax.f32 %v1256, 0.0
          %v1258 = vld [vmem:[#allocation3] sm:$0xff]
          %v1259 = vld [vmem:[%s7] sm:$0x1]
          %v1261 = vlaneseq
          %v1262 = vshrl.u32 %v1261, 7
          %v1263 = vsub.s32 0, %v1262
          %v1264 = vrot.slane %v1259, %v1263
          %v1266 = vadd.f32 %v1258, %v1264
          %v1267 = vmax.f32 %v1266, 0.0
          %v1268 = vld [vmem:[%s5] sm:$0x1]
          %v1270 = vlaneseq
          %v1271 = vshrl.u32 %v1270, 7
          %v1272 = vsub.s32 0, %v1271
          %v1273 = vrot.slane %v1268, %v1272
          %v1275 = vmul.f32 %v1257, %v1273
          %1276 = vadd.xlane.f32.xlu0 %v1275
          %v1277 = vpop.xlane.xlu0 %1276
          %v1278 = vmul.f32 %v1257, %v1257
          %1279 = vadd.xlane.f32.xlu0 %v1278
          %v1280 = vpop.xlane.xlu0 %1279
          %v1281 = vadd.f32 %v1280, 1e-08
          %v1282 = vrsqrt.pop %v1281
          %v1283 = vmul.f32 %v1268, %v1268
          %vm1284 = vcmask 1040384
          %v1285 = vsel %vm1284, %v1283, 0.0
          %1286 = vadd.xlane.f32.xlu0 %v1285
          %v1287 = vpop.xlane.xlu0 %1286
          %v1288 = vrot.slane %v1287, 4
          %v1289 = vadd.f32 %v1287, %v1288
          %v1290 = vrot.slane %v1289, 2
          %v1291 = vadd.f32 %v1289, %v1290
          %v1292 = vrot.slane %v1291, 1
          %v1293 = vadd.f32 %v1291, %v1292
          %s1294 = vtos %v1293
          %v1295 = vstv %s1294
          %v1296 = vadd.f32 %v1295, 1e-08
          %v1297 = vrsqrt.pop %v1296
          %v1298 = vmul.f32 %v1277, 64.0
          %v1299 = vmul.f32 %v1298, %v1282
          %v1300 = vmul.f32 %v1299, %v1297
          %v1301 = vadd.f32 %v1300, -0.4054651
          %v1302 = vmax.f32 %v1301, 0.0
          %v1303 = vmul.f32 %v1301, %v1247
          %v1304 = vsub.f32 %v1302, %v1303
          %v1305 = vand.u32 2147483647, %v1301
          %v1306 = vsub.f32 0.0, %v1305
          %v1307 = vmul.f32 %v1306, 1.442695
          %v1308 = vpow.pop %v1307
          %v1309 = vadd.f32 %v1308, 1.0
          %v1310 = vlog2.pop %v1309
          %v1311 = vmul.f32 %v1310, 0.6931472
          %v1312 = vmul.f32 -0.5, %v1308
          %v1313 = vadd.f32 %v1312, 1.0
          %v1314 = vmul.f32 %v1313, %v1308
          %v1315 = vand.u32 2147483647, %v1308
          %vm1316 = vcmp.lt.f32.partialorder %v1315, 0.0004427343
          %v1317 = vsel %vm1316, %v1314, %v1311
          %v1318 = vadd.f32 %v1304, %v1317
          %vm1319 = vcmask 7168
          %v1320 = vsel %vm1319, %v1318, 0.0
          %1321 = vadd.xlane.f32.xlu0 %v1320
          %v1322 = vpop.xlane.xlu0 %1321
          %v1323 = vrot.slane %v1322, 4
          %v1324 = vadd.f32 %v1322, %v1323
          %v1325 = vrot.slane %v1324, 2
          %v1326 = vadd.f32 %v1324, %v1325
          %v1327 = vrot.slane %v1326, 1
          %v1328 = vadd.f32 %v1326, %v1327
          %s1329 = vtos %v1328
          %s1330 = smul.f32 %s1329, 0.125
          %s1331 = scalar_lea.smem [#allocation4], 0
          %1332 = sst [smem:[%s1331]] %s1330
          %v1333 = vld [vmem:[%s8] sm:$0xff]
          %v1334 = vld [vmem:[%s8 + $0x8] sm:$0xff]
          %v1335 = vld [vmem:[%s8 + $0x10] sm:$0xff]
          %v1336 = vld [vmem:[%s8 + $0x18] sm:$0xff]
          %v1337 = vld [vmem:[%s8 + $0x20] sm:$0xff]
          %v1338 = vld [vmem:[%s8 + $0x28] sm:$0xff]
          %v1339 = vld [vmem:[%s8 + $0x30] sm:$0xff]
          %v1340 = vld [vmem:[%s8 + $0x38] sm:$0xff]
          %v1341 = vld [vmem:[%s8 + $0x40] sm:$0xff]
          %v1342 = vld [vmem:[%s8 + $0x48] sm:$0xff]
          %v1343 = vld [vmem:[%s8 + $0x50] sm:$0xff]
          %v1344 = vld [vmem:[%s8 + $0x58] sm:$0xff]
          %v1345 = vld [vmem:[%s8 + $0x60] sm:$0xff]
          %v1346 = vld [vmem:[%s8 + $0x68] sm:$0xff]
          %v1347 = vld [vmem:[%s8 + $0x70] sm:$0xff]
          %v1348 = vld [vmem:[%s8 + $0x78] sm:$0xff]
          %v1349 = vld [vmem:[%s9] sm:$0x1]
          %v1351 = vlaneseq
          %v1352 = vshrl.u32 %v1351, 7
          %v1353 = vsub.s32 0, %v1352
          %v1354 = vrot.slane %v1349, %v1353
          %1356 = vmatprep.subr.mxu0 0.0
          %1357 = vmatpush1.msra.mxu0 %v1333
          %1358 = vmatprep.subr.mxu0 0.0
          %1359 = vmatpush1.msra.mxu0 %v1334
          %1360 = vmatprep.subr.mxu0 0.0
          %1361 = vmatpush1.msra.mxu0 %v1335
          %1362 = vmatprep.subr.mxu0 0.0
          %1363 = vmatpush1.msra.mxu0 %v1336
          %1364 = vmatprep.subr.mxu0 0.0
          %1365 = vmatpush1.msra.mxu0 %v1337
          %1366 = vmatprep.subr.mxu0 0.0
          %1367 = vmatpush1.msra.mxu0 %v1338
          %1368 = vmatprep.subr.mxu0 0.0
          %1369 = vmatpush1.msra.mxu0 %v1339
          %1370 = vmatprep.subr.mxu0 0.0
          %1371 = vmatpush1.msra.mxu0 %v1340
          %1372 = vmatprep.subr.mxu0 0.0
          %1373 = vmatpush1.msra.mxu0 %v1341
          %1374 = vmatprep.subr.mxu0 0.0
          %1375 = vmatpush1.msra.mxu0 %v1342
          %1376 = vmatprep.subr.mxu0 0.0
          %1377 = vmatpush1.msra.mxu0 %v1343
          %1378 = vmatprep.subr.mxu0 0.0
          %1379 = vmatpush1.msra.mxu0 %v1344
          %1380 = vmatprep.subr.mxu0 0.0
          %1381 = vmatpush1.msra.mxu0 %v1345
          %1382 = vmatprep.subr.mxu0 0.0
          %1383 = vmatpush1.msra.mxu0 %v1346
          %1384 = vmatprep.subr.mxu0 0.0
          %1385 = vmatpush1.msra.mxu0 %v1347
          %1386 = vmatprep.subr.mxu0 0.0
          %1387 = vmatpush1.msra.mxu0 %v1348
          %1388 = vmatprep.subr.mxu0 0.0
          %1389 = vmatpush1.msra.mxu0 0.0
          %1390 = vmatprep.subr.mxu0 0.0
          %1391 = vmatpush1.msra.mxu0 0.0
          %1392 = vmatprep.subr.mxu0 0.0
          %1393 = vmatpush1.msra.mxu0 0.0
          %1394 = vmatprep.subr.mxu0 0.0
          %1395 = vmatpush1.msra.mxu0 0.0
          %1396 = vmatprep.subr.mxu0 0.0
          %1397 = vmatpush1.msra.mxu0 0.0
          %1398 = vmatprep.subr.mxu0 0.0
          %1399 = vmatpush1.msra.mxu0 0.0
          %1400 = vmatprep.subr.mxu0 0.0
          %1401 = vmatpush1.msra.mxu0 0.0
          %1402 = vmatprep.subr.mxu0 0.0
          %1403 = vmatpush1.msra.mxu0 0.0
          %1404 = vmatprep.subr.mxu0 0.0
          %1405 = vmatpush1.msra.mxu0 0.0
          %1406 = vmatprep.subr.mxu0 0.0
          %1407 = vmatpush1.msra.mxu0 0.0
          %1408 = vmatprep.subr.mxu0 0.0
          %1409 = vmatpush1.msra.mxu0 0.0
          %1410 = vmatprep.subr.mxu0 0.0
          %1411 = vmatpush1.msra.mxu0 0.0
          %1412 = vmatprep.subr.mxu0 0.0
          %1413 = vmatpush1.msra.mxu0 0.0
          %1414 = vmatprep.subr.mxu0 0.0
          %1415 = vmatpush1.msra.mxu0 0.0
          %1416 = vmatprep.subr.mxu0 0.0
          %1417 = vmatpush1.msra.mxu0 0.0
          %1418 = vmatprep.subr.mxu0 0.0
          %1419 = vmatpush1.msra.mxu0 0.0
          %1420 = vmatprep.mubr.f32.mxu0 0.0
          %1421 = vmatmul.mubr.f32.gmra.mrb[0].mxu0 %v1267
          %v1422 = vpop.f32.mrb[0].mxu0
          %v1423 = vadd.f32 %v1354, %v1422
          %v1424 = vpop.f32.mrb[0].mxu0
          %1425 = vdwg.mxu0
          %v1426 = vld [vmem:[%s10] sm:$0xff]
          %v1427 = vld [vmem:[%s10 + $0x8] sm:$0xff]
          %v1428 = vld [vmem:[%s10 + $0x10] sm:$0xff]
          %v1429 = vld [vmem:[%s10 + $0x18] sm:$0xff]
          %v1430 = vld [vmem:[%s10 + $0x20] sm:$0xff]
          %v1431 = vld [vmem:[%s10 + $0x28] sm:$0xff]
          %v1432 = vld [vmem:[%s10 + $0x30] sm:$0xff]
          %v1433 = vld [vmem:[%s10 + $0x38] sm:$0xff]
          %v1434 = vld [vmem:[%s10 + $0x40] sm:$0xff]
          %v1435 = vld [vmem:[%s10 + $0x48] sm:$0xff]
          %v1436 = vld [vmem:[%s10 + $0x50] sm:$0xff]
          %v1437 = vld [vmem:[%s10 + $0x58] sm:$0xff]
          %v1438 = vld [vmem:[%s10 + $0x60] sm:$0xff]
          %v1439 = vld [vmem:[%s10 + $0x68] sm:$0xff]
          %v1440 = vld [vmem:[%s10 + $0x70] sm:$0xff]
          %v1441 = vld [vmem:[%s10 + $0x78] sm:$0xff]
          %v1442 = vld [vmem:[%s11] sm:$0x1]
          %v1444 = vlaneseq
          %v1445 = vshrl.u32 %v1444, 7
          %v1446 = vsub.s32 0, %v1445
          %v1447 = vrot.slane %v1442, %v1446
          %1449 = vmatprep.subr.mxu0 0.0
          %1450 = vmatpush1.msra.mxu0 %v1426
          %1451 = vmatprep.subr.mxu0 0.0
          %1452 = vmatpush1.msra.mxu0 %v1427
          %1453 = vmatprep.subr.mxu0 0.0
          %1454 = vmatpush1.msra.mxu0 %v1428
          %1455 = vmatprep.subr.mxu0 0.0
          %1456 = vmatpush1.msra.mxu0 %v1429
          %1457 = vmatprep.subr.mxu0 0.0
          %1458 = vmatpush1.msra.mxu0 %v1430
          %1459 = vmatprep.subr.mxu0 0.0
          %1460 = vmatpush1.msra.mxu0 %v1431
          %1461 = vmatprep.subr.mxu0 0.0
          %1462 = vmatpush1.msra.mxu0 %v1432
          %1463 = vmatprep.subr.mxu0 0.0
          %1464 = vmatpush1.msra.mxu0 %v1433
          %1465 = vmatprep.subr.mxu0 0.0
          %1466 = vmatpush1.msra.mxu0 %v1434
          %1467 = vmatprep.subr.mxu0 0.0
          %1468 = vmatpush1.msra.mxu0 %v1435
          %1469 = vmatprep.subr.mxu0 0.0
          %1470 = vmatpush1.msra.mxu0 %v1436
          %1471 = vmatprep.subr.mxu0 0.0
          %1472 = vmatpush1.msra.mxu0 %v1437
          %1473 = vmatprep.subr.mxu0 0.0
          %1474 = vmatpush1.msra.mxu0 %v1438
          %1475 = vmatprep.subr.mxu0 0.0
          %1476 = vmatpush1.msra.mxu0 %v1439
          %1477 = vmatprep.subr.mxu0 0.0
          %1478 = vmatpush1.msra.mxu0 %v1440
          %1479 = vmatprep.subr.mxu0 0.0
          %1480 = vmatpush1.msra.mxu0 %v1441
          %1481 = vmatprep.subr.mxu0 0.0
          %1482 = vmatpush1.msra.mxu0 0.0
          %1483 = vmatprep.subr.mxu0 0.0
          %1484 = vmatpush1.msra.mxu0 0.0
          %1485 = vmatprep.subr.mxu0 0.0
          %1486 = vmatpush1.msra.mxu0 0.0
          %1487 = vmatprep.subr.mxu0 0.0
          %1488 = vmatpush1.msra.mxu0 0.0
          %1489 = vmatprep.subr.mxu0 0.0
          %1490 = vmatpush1.msra.mxu0 0.0
          %1491 = vmatprep.subr.mxu0 0.0
          %1492 = vmatpush1.msra.mxu0 0.0
          %1493 = vmatprep.subr.mxu0 0.0
          %1494 = vmatpush1.msra.mxu0 0.0
          %1495 = vmatprep.subr.mxu0 0.0
          %1496 = vmatpush1.msra.mxu0 0.0
          %1497 = vmatprep.subr.mxu0 0.0
          %1498 = vmatpush1.msra.mxu0 0.0
          %1499 = vmatprep.subr.mxu0 0.0
          %1500 = vmatpush1.msra.mxu0 0.0
          %1501 = vmatprep.subr.mxu0 0.0
          %1502 = vmatpush1.msra.mxu0 0.0
          %1503 = vmatprep.subr.mxu0 0.0
          %1504 = vmatpush1.msra.mxu0 0.0
          %1505 = vmatprep.subr.mxu0 0.0
          %1506 = vmatpush1.msra.mxu0 0.0
          %1507 = vmatprep.subr.mxu0 0.0
          %1508 = vmatpush1.msra.mxu0 0.0
          %1509 = vmatprep.subr.mxu0 0.0
          %1510 = vmatpush1.msra.mxu0 0.0
          %1511 = vmatprep.subr.mxu0 0.0
          %1512 = vmatpush1.msra.mxu0 0.0
          %1513 = vmatprep.mubr.f32.mxu0 0.0
          %1514 = vmatmul.mubr.f32.gmra.mrb[0].mxu0 %v1257
          %v1515 = vpop.f32.mrb[0].mxu0
          %v1516 = vadd.f32 %v1447, %v1515
          %v1517 = vpop.f32.mrb[0].mxu0
          %1518 = vdwg.mxu0
          %v1519 = vmax.f32 %v1516, 0.0
          %v1520 = vld [vmem:[%s12] sm:$0xff]
          %v1521 = vld [vmem:[%s12 + $0x8] sm:$0xff]
          %v1522 = vld [vmem:[%s12 + $0x10] sm:$0xff]
          %v1523 = vld [vmem:[%s12 + $0x18] sm:$0xff]
          %v1524 = vld [vmem:[%s12 + $0x20] sm:$0xff]
          %v1525 = vld [vmem:[%s12 + $0x28] sm:$0xff]
          %v1526 = vld [vmem:[%s12 + $0x30] sm:$0xff]
          %v1527 = vld [vmem:[%s12 + $0x38] sm:$0xff]
          %v1528 = vld [vmem:[%s12 + $0x40] sm:$0xff]
          %v1529 = vld [vmem:[%s12 + $0x48] sm:$0xff]
          %v1530 = vld [vmem:[%s12 + $0x50] sm:$0xff]
          %v1531 = vld [vmem:[%s12 + $0x58] sm:$0xff]
          %v1532 = vld [vmem:[%s12 + $0x60] sm:$0xff]
          %v1533 = vld [vmem:[%s12 + $0x68] sm:$0xff]
          %v1534 = vld [vmem:[%s12 + $0x70] sm:$0xff]
          %v1535 = vld [vmem:[%s12 + $0x78] sm:$0xff]
          %v1536 = vld [vmem:[%s13] sm:$0x1]
          %v1538 = vlaneseq
          %v1539 = vshrl.u32 %v1538, 7
          %v1540 = vsub.s32 0, %v1539
          %v1541 = vrot.slane %v1536, %v1540
          %1543 = vmatprep.subr.mxu0 0.0
          %1544 = vmatpush1.msra.mxu0 %v1520
          %1545 = vmatprep.subr.mxu0 0.0
          %1546 = vmatpush1.msra.mxu0 %v1521
          %1547 = vmatprep.subr.mxu0 0.0
          %1548 = vmatpush1.msra.mxu0 %v1522
          %1549 = vmatprep.subr.mxu0 0.0
          %1550 = vmatpush1.msra.mxu0 %v1523
          %1551 = vmatprep.subr.mxu0 0.0
          %1552 = vmatpush1.msra.mxu0 %v1524
          %1553 = vmatprep.subr.mxu0 0.0
          %1554 = vmatpush1.msra.mxu0 %v1525
          %1555 = vmatprep.subr.mxu0 0.0
          %1556 = vmatpush1.msra.mxu0 %v1526
          %1557 = vmatprep.subr.mxu0 0.0
          %1558 = vmatpush1.msra.mxu0 %v1527
          %1559 = vmatprep.subr.mxu0 0.0
          %1560 = vmatpush1.msra.mxu0 %v1528
          %1561 = vmatprep.subr.mxu0 0.0
          %1562 = vmatpush1.msra.mxu0 %v1529
          %1563 = vmatprep.subr.mxu0 0.0
          %1564 = vmatpush1.msra.mxu0 %v1530
          %1565 = vmatprep.subr.mxu0 0.0
          %1566 = vmatpush1.msra.mxu0 %v1531
          %1567 = vmatprep.subr.mxu0 0.0
          %1568 = vmatpush1.msra.mxu0 %v1532
          %1569 = vmatprep.subr.mxu0 0.0
          %1570 = vmatpush1.msra.mxu0 %v1533
          %1571 = vmatprep.subr.mxu0 0.0
          %1572 = vmatpush1.msra.mxu0 %v1534
          %1573 = vmatprep.subr.mxu0 0.0
          %1574 = vmatpush1.msra.mxu0 %v1535
          %1575 = vmatprep.subr.mxu0 0.0
          %1576 = vmatpush1.msra.mxu0 0.0
          %1577 = vmatprep.subr.mxu0 0.0
          %1578 = vmatpush1.msra.mxu0 0.0
          %1579 = vmatprep.subr.mxu0 0.0
          %1580 = vmatpush1.msra.mxu0 0.0
          %1581 = vmatprep.subr.mxu0 0.0
          %1582 = vmatpush1.msra.mxu0 0.0
          %1583 = vmatprep.subr.mxu0 0.0
          %1584 = vmatpush1.msra.mxu0 0.0
          %1585 = vmatprep.subr.mxu0 0.0
          %1586 = vmatpush1.msra.mxu0 0.0
          %1587 = vmatprep.subr.mxu0 0.0
          %1588 = vmatpush1.msra.mxu0 0.0
          %1589 = vmatprep.subr.mxu0 0.0
          %1590 = vmatpush1.msra.mxu0 0.0
          %1591 = vmatprep.subr.mxu0 0.0
          %1592 = vmatpush1.msra.mxu0 0.0
          %1593 = vmatprep.subr.mxu0 0.0
          %1594 = vmatpush1.msra.mxu0 0.0
          %1595 = vmatprep.subr.mxu0 0.0
          %1596 = vmatpush1.msra.mxu0 0.0
          %1597 = vmatprep.subr.mxu0 0.0
          %1598 = vmatpush1.msra.mxu0 0.0
          %1599 = vmatprep.subr.mxu0 0.0
          %1600 = vmatpush1.msra.mxu0 0.0
          %1601 = vmatprep.subr.mxu0 0.0
          %1602 = vmatpush1.msra.mxu0 0.0
          %1603 = vmatprep.subr.mxu0 0.0
          %1604 = vmatpush1.msra.mxu0 0.0
          %1605 = vmatprep.subr.mxu0 0.0
          %1606 = vmatpush1.msra.mxu0 0.0
          %1607 = vmatprep.mubr.f32.mxu0 0.0
          %1608 = vmatmul.mubr.f32.gmra.mrb[0].mxu0 %v1519
          %v1609 = vpop.f32.mrb[0].mxu0
          %v1610 = vadd.f32 %v1541, %v1609
          %v1611 = vpop.f32.mrb[0].mxu0
          %1612 = vdwg.mxu0
          %v1613 = vmul.f32 %v1610, %v1423
          %1614 = vadd.xlane.f32.xlu0 %v1613
          %v1615 = vpop.xlane.xlu0 %1614
          %v1616 = vmul.f32 %v1610, %v1610
          %1617 = vadd.xlane.f32.xlu0 %v1616
          %v1618 = vpop.xlane.xlu0 %1617
          %v1619 = vrsqrt.pop %v1618
          %v1620 = vmul.f32 %v1618, %v1619
          %vm1621 = vcmp.eq.f32.partialorder %v1618, inf
          %v1622 = vsel %vm1621, %v1618, %v1620
          %vm1623 = vcmp.eq.f32.partialorder %v1618, 0.0
          %v1624 = vand.u32 %v1618, 2147483648
          %v1625 = vsel %vm1623, %v1624, %v1622
          %v1626 = vmul.f32 %v1423, %v1423
          %1627 = vadd.xlane.f32.xlu0 %v1626
          %v1628 = vpop.xlane.xlu0 %1627
          %v1629 = vrsqrt.pop %v1628
          %v1630 = vmul.f32 %v1628, %v1629
          %vm1631 = vcmp.eq.f32.partialorder %v1628, inf
          %v1632 = vsel %vm1631, %v1628, %v1630
          %vm1633 = vcmp.eq.f32.partialorder %v1628, 0.0
          %v1634 = vand.u32 %v1628, 2147483648
          %v1635 = vsel %vm1633, %v1634, %v1632
          %v1636 = vmul.f32 %v1625, %v1635
          %v1637 = vmax.f32 %v1636, 1e-08
          %v1638 = vrcp.pop %v1637
          %v1639 = vmul.f32 %v1615, %v1638
          %vm1640 = vcmp.eq.f32.partialorder %v1247, 0.0
          %v1641 = vsel %vm1640, 1, 0
          %v1642 = vcvt.s32.f32 %v1641
          %v1643 = vsel %vm1319, %v1642, 0.0
          %1644 = vadd.xlane.f32.xlu0 %v1643
          %v1645 = vpop.xlane.xlu0 %1644
          %v1646 = vrot.slane %v1645, 4
          %v1647 = vadd.f32 %v1645, %v1646
          %v1648 = vrot.slane %v1647, 2
          %v1649 = vadd.f32 %v1647, %v1648
          %v1650 = vrot.slane %v1649, 1
          %v1651 = vadd.f32 %v1649, %v1650
          %s1652 = vtos %v1651
          %v1653 = vmul.f32 %v1639, %v1642
          %v1654 = vsel %vm1319, %v1653, 0.0
          %1655 = vadd.xlane.f32.xlu0 %v1654
          %v1656 = vpop.xlane.xlu0 %1655
          %v1657 = vrot.slane %v1656, 4
          %v1658 = vadd.f32 %v1656, %v1657
          %v1659 = vrot.slane %v1658, 2
          %v1660 = vadd.f32 %v1658, %v1659
          %v1661 = vrot.slane %v1660, 1
          %v1662 = vadd.f32 %v1660, %v1661
          %s1663 = vtos %v1662
          %s1664 = smax.f32 %s1652, 1.0
          %v1665 = vstv %s1664
          %v1666 = vrcp.pop %v1665
          %s1667 = vtos %v1666
          %s1668 = smul.f32 %s1663, %s1667
          %s1669 = scalar_lea.smem [#allocation4], 1
          %1670 = sst [smem:[%s1669]] %s1668
        $region84: #{model_combined_forward.1} parent=75 // pred_fallthru
          _
        // Predicated region
        $region85: #{model_combined_forward.1} parent=75 // pred_check
          %p1671 = pneg %p353
        $region86: #{model_combined_forward.1} parent=75 // pred_check_branch
          %1673 = sbr.rel (%p1671) target = $region88
        $region87: #{model_combined_forward.1} parent=75 // pred_region
          %s1675 = ssub.s32 16, 16
          %1676 = vsyncadd [#allocation5], %s1675
          %s1678 = sshll.u32 %s14, 4
          %s1679 = int_to_ptr.vmem [resolvable:$true] %s1678
          %1681 = dma.smem_to_vmem [#allocation4], 16, %s1679, [#allocation5]
        $region88: #{model_combined_forward.1} parent=75 // pred_fallthru
          _
        // Predicated region
        $region89: #{model_combined_forward.1} parent=75 // pred_check
          %p1682 = pneg %p353
        $region90: #{model_combined_forward.1} parent=75 // pred_check_branch
          %1684 = sbr.rel (%p1682) target = $region92
        $region91: #{model_combined_forward.1} parent=75 // pred_region
          %1685 = dma.done [#allocation5], 16
        $region92: #{model_combined_forward.1} parent=75 // pred_fallthru
          _
        %1686 = sfence
      $region76: #{model_combined_forward.1} parent=5 // pred_fallthru
        _
      %p1687 = scmp.le.s32.totalorder 2, %s21
      // Predicated region
      $region93: #{model_combined_forward.1} parent=5 // pred_check
        %p1688 = pneg %p1687
      $region94: #{model_combined_forward.1} parent=5 // pred_check_branch
        %1690 = sbr.rel (%p1688) target = $region96
      $region95: #{model_combined_forward.1} parent=5 // pred_region
        %s1691 = ssub.s32 %s21, 2
      $region96: #{model_combined_forward.1} parent=5 // pred_fallthru
        _
    $region6: #{model_combined_forward.1} parent=1 // loop_footer
      %s25 = sadd.s32 1, %s21
    $region7: #{model_combined_forward.1} parent=1 // loop_footer_branch
      %20 = sbr.rel target = $region3
    $region8: #{model_combined_forward.1} parent=1 // loop_exit
      _
    %1692 = vsyncpa [#allocation5], 1
    %s1693 = scalar_lea.sflag [#allocation5], 1
    %1694 = vsyncpa %s1693, 1

</llo_original>
